<compile_context>
chip_gen: v6e
topology: v6e:2x2x1
jax: 0.10.0
libtpu: 0.0.40
codegen_flags: <defaults>
</compile_context>

<pallas_src>
import numpy as np
import jax
import jax.numpy as jnp
from jax.experimental import pallas as pl
from jax.experimental.pallas import tpu as pltpu

EPS = 1e-5
LANE = 128
H1, H2 = 128, 256  # hidden widths of the module


def dqn_kernel(x_ref, w1_ref, w2_ref, w3_ref, b3_ref, out_ref):
    G, GB, SP = x_ref.shape          # G groups of GB rows, state padded to SP lanes
    M = G * GB

    # ---- Layer 1: (M, SP) @ (SP, 128).  b1 omitted (cancelled by BN1 mean subtraction).
    x = x_ref[...].reshape(M, SP)
    h1 = jnp.dot(x, w1_ref[...], preferred_element_type=jnp.float32)

    # ---- BatchNorm1d(128), training stats per group.  gamma1 folded into w2 downstream.
    # Two independent sublane reductions (mean, mean-of-squares) -> shorter latency chain.
    h1g = h1.reshape(G, GB, H1)                      # tile-aligned reshape (8,128) -> no relayout
    m1 = jnp.mean(h1g, axis=1, keepdims=True)
    s1 = jnp.mean(h1g * h1g, axis=1, keepdims=True)
    v1 = jnp.maximum(s1 - m1 * m1, 0.0)
    n1 = ((h1g - m1) * jax.lax.rsqrt(v1 + EPS)).reshape(M, H1)

    # ---- Layer 2: (M, 128) @ (128, 256), w2 pre-scaled by gamma1.
    # b2 and the beta1@w2 constant are cancelled by BN2's mean subtraction.
    h2 = jnp.dot(n1, w2_ref[...], preferred_element_type=jnp.float32)

    # ---- BatchNorm1d(256), training stats per group.  gamma2/beta2 folded into (w3, b3).
    h2g = h2.reshape(G, GB, H2)
    m2 = jnp.mean(h2g, axis=1, keepdims=True)
    s2 = jnp.mean(h2g * h2g, axis=1, keepdims=True)
    v2 = jnp.maximum(s2 - m2 * m2, 0.0)
    n2 = ((h2g - m2) * jax.lax.rsqrt(v2 + EPS)).reshape(M, H2)

    # ---- Layer 3: (M, 256) @ (256, A_padded) + bias.  Lane-dense (padded-to-128) store.
    out = jnp.dot(n2, w3_ref[...], preferred_element_type=jnp.float32) + b3_ref[...]
    out_ref[...] = out.reshape(G, GB, out.shape[-1])


def fold_params(p):
    """One-time algebraic fold of the PyTorch-style parameters (host side):
      - drop b1/b2 (cancelled by training-mode BN mean subtraction)
      - w2' = gamma1[:, None] * w2           (beta1 term cancelled by BN2)
      - w3' = gamma2[:, None] * w3
      - b3' = beta2 @ w3 + b3
      - zero-pad w1 rows (state dim) up to 128 and w3'/b3' columns up to 128
        for lane-dense loads/stores.
    """
    S = p["w1"].shape[0]
    A = p["w3"].shape[1]
    SP = ((S + LANE - 1) // LANE) * LANE
    Ap = ((A + LANE - 1) // LANE) * LANE

    w1p = jnp.pad(p["w1"], ((0, SP - S), (0, 0)))
    w2f = p["g1"].reshape(-1, 1) * p["w2"]
    w3f = p["g2"].reshape(-1, 1) * p["w3"]
    b3f = p["be2"] @ p["w3"] + p["b3"]
    if Ap > A:
        w3f = jnp.pad(w3f, ((0, 0), (0, Ap - A)))
        b3f = jnp.pad(b3f, ((0, 0), (0, Ap - A)))
    return {"w1p": w1p, "w2f": w2f, "w3f": w3f, "b3f": b3f, "S": S, "A": A}


def dqn_forward(x_groups, fp, groups_per_step=16):
    """x_groups: (num_groups, group_b, state_length) float32 — num_groups independent
    inference batches, each normalized with its own (training-mode) BN statistics.
    Returns (num_groups, group_b, action_length)."""
    N, GB, S = x_groups.shape
    SP = fp["w1p"].shape[0]
    Ap = fp["w3f"].shape[1]
    A = fp["A"]
    assert S == fp["S"]

    G = max(1, min(groups_per_step, N))        # groups per grid step (M = G*GB rows)
    Np = ((N + G - 1) // G) * G                # pad group count to a multiple of G

    # Pad state dim to SP (lane-dense K) and group count to Np (zero groups are BN-safe
    # because biases are dropped: all-zero rows stay all-zero and are sliced off below).
    xp = jnp.zeros((Np, GB, SP), jnp.float32).at[:N, :, :S].set(x_groups)

    flops = 2 * Np * GB * (SP * H1 + H1 * H2 + H2 * Ap)
    bytes_accessed = 4 * (Np * GB * SP + SP * H1 + H1 * H2 + H2 * Ap + Ap + Np * GB * Ap)
    transcendentals = Np * (H1 + H2)           # per-group rsqrt of the two BN variances

    out = pl.pallas_call(
        dqn_kernel,
        out_shape=jax.ShapeDtypeStruct((Np, GB, Ap), jnp.float32),
        grid_spec=pltpu.PrefetchScalarGridSpec(
            num_scalar_prefetch=0,
            grid=(Np // G,),
            in_specs=[
                pl.BlockSpec((G, GB, SP), lambda i: (i, 0, 0)),   # x: tiled along groups
                pl.BlockSpec((SP, H1), lambda i: (0, 0)),         # weights: resident
                pl.BlockSpec((H1, H2), lambda i: (0, 0)),
                pl.BlockSpec((H2, Ap), lambda i: (0, 0)),
                pl.BlockSpec((1, Ap), lambda i: (0, 0)),
            ],
            out_specs=pl.BlockSpec((G, GB, Ap), lambda i: (i, 0, 0)),
        ),
        compiler_params=pltpu.CompilerParams(dimension_semantics=("parallel",)),
        cost_estimate=pl.CostEstimate(
            flops=flops, transcendentals=transcendentals, bytes_accessed=bytes_accessed
        ),
    )(xp, fp["w1p"], fp["w2f"], fp["w3f"], fp["b3f"])
    return out[:N, :, :A]


def init_params(key, state_length, action_length):
    """Deterministic init mimicking PyTorch defaults:
    Linear: U(-1/sqrt(fan_in), 1/sqrt(fan_in)) for weight and bias.
    BatchNorm1d: gamma=1, beta=0.
    Weights stored as (in, out) so the math is x @ W; biases as (1, N)."""
    ks = jax.random.split(key, 6)

    def linear(kw, kb, fan_in, fan_out):
        bound = 1.0 / jnp.sqrt(jnp.float32(fan_in))
        w = jax.random.uniform(kw, (fan_in, fan_out), jnp.float32, -bound, bound)
        b = jax.random.uniform(kb, (1, fan_out), jnp.float32, -bound, bound)
        return w, b

    w1, b1 = linear(ks[0], ks[1], state_length, H1)
    w2, b2 = linear(ks[2], ks[3], H1, H2)
    w3, b3 = linear(ks[4], ks[5], H2, action_length)

    return {
        "w1": w1, "b1": b1,
        "g1": jnp.ones((1, H1), jnp.float32), "be1": jnp.zeros((1, H1), jnp.float32),
        "w2": w2, "b2": b2,
        "g2": jnp.ones((1, H2), jnp.float32), "be2": jnp.zeros((1, H2), jnp.float32),
        "w3": w3, "b3": b3,
    }


def dqn_reference_np(x_groups, p):
    """float64 NumPy reference of the ORIGINAL (un-folded) module, training-mode BN,
    applied independently to each group (== one PyTorch forward call per group)."""
    xg = np.asarray(x_groups, np.float64)
    P = {k: np.asarray(v, np.float64) for k, v in p.items()}
    outs = []
    for x in xg:
        h1 = x @ P["w1"] + P["b1"]
        m1 = h1.mean(0, keepdims=True)
        v1 = ((h1 - m1) ** 2).mean(0, keepdims=True)
        h1 = (h1 - m1) / np.sqrt(v1 + EPS) * P["g1"] + P["be1"]
        h2 = h1 @ P["w2"] + P["b2"]
        m2 = h2.mean(0, keepdims=True)
        v2 = ((h2 - m2) ** 2).mean(0, keepdims=True)
        h2 = (h2 - m2) / np.sqrt(v2 + EPS) * P["g2"] + P["be2"]
        outs.append(h2 @ P["w3"] + P["b3"])
    return np.stack(outs)


if __name__ == "__main__":
    key = jax.random.PRNGKey(0)
    k_x, k_p = jax.random.split(key)

    NUM_BATCHES, GROUP_B, STATE_LEN, ACTION_LEN = 32, 8, 16, 4
    x = jax.random.normal(k_x, (NUM_BATCHES, GROUP_B, STATE_LEN), jnp.float32)
    params = init_params(k_p, STATE_LEN, ACTION_LEN)
    folded = fold_params(params)

    # Batched path: 32 independent batches of 8, 16 groups per grid step (M = 128).
    out = jax.block_until_ready(dqn_forward(x, folded, groups_per_step=16))
    assert out.shape == (NUM_BATCHES, GROUP_B, ACTION_LEN)

    ref = dqn_reference_np(x, params)
    # Tolerance covers TPU f32 matmul emulation (bf16 passes) vs the float64 reference.
    assert np.allclose(np.asarray(out, np.float64), ref, atol=1e-3, rtol=1e-3), \
        "mismatch vs reference (batched path)"

    # Single-batch path == one plain forward of the original module.
    out1 = jax.block_until_ready(dqn_forward(x[:1], folded, groups_per_step=1))
    assert np.allclose(np.asarray(out1, np.float64), ref[:1], atol=1e-3, rtol=1e-3), \
        "mismatch vs reference (single-batch path)"

    print("KERNEL_OK")
</pallas_src>

<mosaic_0001>
module attributes {stable_mosaic.version = 11 : i64} {
  func.func @dqn_kernel(%arg0: i32, %arg1: memref<16x8x128xf32, #tpu.memory_space<vmem>>, %arg2: memref<128x128xf32, #tpu.memory_space<vmem>>, %arg3: memref<128x256xf32, #tpu.memory_space<vmem>>, %arg4: memref<256x128xf32, #tpu.memory_space<vmem>>, %arg5: memref<1x128xf32, #tpu.memory_space<vmem>>, %arg6: memref<16x8x128xf32, #tpu.memory_space<vmem>>) attributes {dimension_semantics = [#tpu.dimension_semantics<parallel>], iteration_bounds = array<i64: 2>, scalar_prefetch = 0 : i64, scratch_operands = 0 : i64, tpu.core_type = #tpu.core_type<tc>, window_params = [{transform_indices = @transform_0, window_bounds = array<i64: 16, 8, 128>}, {pipeline_mode = #tpu.pipeline_mode<synchronous>, transform_indices = @transform_1, window_bounds = array<i64: 128, 128>}, {pipeline_mode = #tpu.pipeline_mode<synchronous>, transform_indices = @transform_2, window_bounds = array<i64: 128, 256>}, {pipeline_mode = #tpu.pipeline_mode<synchronous>, transform_indices = @transform_3, window_bounds = array<i64: 256, 128>}, {pipeline_mode = #tpu.pipeline_mode<synchronous>, transform_indices = @transform_4, window_bounds = array<i64: 1, 128>}, {transform_indices = @transform_5, window_bounds = array<i64: 16, 8, 128>}]} {
    %c0 = arith.constant 0 : index
    %c0_0 = arith.constant 0 : index
    %c0_1 = arith.constant 0 : index
    %0 = vector.load %arg1[%c0, %c0_0, %c0_1] : memref<16x8x128xf32, #tpu.memory_space<vmem>>, vector<16x8x128xf32>
    %1 = vector.shape_cast %0 : vector<16x8x128xf32> to vector<128x128xf32>
    %c0_2 = arith.constant 0 : index
    %c0_3 = arith.constant 0 : index
    %2 = vector.load %arg2[%c0_2, %c0_3] : memref<128x128xf32, #tpu.memory_space<vmem>>, vector<128x128xf32>
    %cst = arith.constant dense<0.000000e+00> : vector<128x128xf32>
    %3 = tpu.matmul %1, %2, %cst {dimension_numbers = #tpu.dot_dimension_numbers<[1], [0], [0], [1], [0, 0, 1, 1], [], []>} : vector<128x128xf32>, vector<128x128xf32>, vector<128x128xf32> -> vector<128x128xf32>
    %4 = vector.shape_cast %3 : vector<128x128xf32> to vector<16x8x128xf32>
    %cst_4 = arith.constant dense<0.000000e+00> : vector<16x128xf32>
    %5 = vector.multi_reduction <add>, %4, %cst_4 [1] : vector<16x8x128xf32> to vector<16x128xf32>
    %6 = vector.shape_cast %5 : vector<16x128xf32> to vector<16x1x128xf32>
    %cst_5 = arith.constant 8.000000e+00 : f32
    %7 = vector.broadcast %cst_5 : f32 to vector<16x1x128xf32>
    %8 = arith.divf %6, %7 : vector<16x1x128xf32>
    %9 = arith.mulf %4, %4 : vector<16x8x128xf32>
    %cst_6 = arith.constant dense<0.000000e+00> : vector<16x128xf32>
    %10 = vector.multi_reduction <add>, %9, %cst_6 [1] : vector<16x8x128xf32> to vector<16x128xf32>
    %11 = vector.shape_cast %10 : vector<16x128xf32> to vector<16x1x128xf32>
    %cst_7 = arith.constant 8.000000e+00 : f32
    %12 = vector.broadcast %cst_7 : f32 to vector<16x1x128xf32>
    %13 = arith.divf %11, %12 : vector<16x1x128xf32>
    %14 = arith.mulf %8, %8 : vector<16x1x128xf32>
    %15 = arith.subf %13, %14 : vector<16x1x128xf32>
    %cst_8 = arith.constant 0.000000e+00 : f32
    %16 = vector.broadcast %cst_8 : f32 to vector<16x1x128xf32>
    %17 = arith.maximumf %15, %16 : vector<16x1x128xf32>
    %18 = vector.broadcast %8 : vector<16x1x128xf32> to vector<16x8x128xf32>
    %19 = arith.subf %4, %18 : vector<16x8x128xf32>
    %cst_9 = arith.constant 9.99999974E-6 : f32
    %20 = vector.broadcast %cst_9 : f32 to vector<16x1x128xf32>
    %21 = arith.addf %17, %20 : vector<16x1x128xf32>
    %22 = math.rsqrt %21 : vector<16x1x128xf32>
    %23 = vector.broadcast %22 : vector<16x1x128xf32> to vector<16x8x128xf32>
    %24 = arith.mulf %19, %23 : vector<16x8x128xf32>
    %25 = vector.shape_cast %24 : vector<16x8x128xf32> to vector<128x128xf32>
    %c0_10 = arith.constant 0 : index
    %c0_11 = arith.constant 0 : index
    %26 = vector.load %arg3[%c0_10, %c0_11] : memref<128x256xf32, #tpu.memory_space<vmem>>, vector<128x256xf32>
    %cst_12 = arith.constant dense<0.000000e+00> : vector<128x256xf32>
    %27 = tpu.matmul %25, %26, %cst_12 {dimension_numbers = #tpu.dot_dimension_numbers<[1], [0], [0], [1], [0, 0, 1, 1], [], []>} : vector<128x128xf32>, vector<128x256xf32>, vector<128x256xf32> -> vector<128x256xf32>
    %28 = vector.shape_cast %27 : vector<128x256xf32> to vector<16x8x256xf32>
    %cst_13 = arith.constant dense<0.000000e+00> : vector<16x256xf32>
    %29 = vector.multi_reduction <add>, %28, %cst_13 [1] : vector<16x8x256xf32> to vector<16x256xf32>
    %30 = vector.shape_cast %29 : vector<16x256xf32> to vector<16x1x256xf32>
    %cst_14 = arith.constant 8.000000e+00 : f32
    %31 = vector.broadcast %cst_14 : f32 to vector<16x1x256xf32>
    %32 = arith.divf %30, %31 : vector<16x1x256xf32>
    %33 = arith.mulf %28, %28 : vector<16x8x256xf32>
    %cst_15 = arith.constant dense<0.000000e+00> : vector<16x256xf32>
    %34 = vector.multi_reduction <add>, %33, %cst_15 [1] : vector<16x8x256xf32> to vector<16x256xf32>
    %35 = vector.shape_cast %34 : vector<16x256xf32> to vector<16x1x256xf32>
    %cst_16 = arith.constant 8.000000e+00 : f32
    %36 = vector.broadcast %cst_16 : f32 to vector<16x1x256xf32>
    %37 = arith.divf %35, %36 : vector<16x1x256xf32>
    %38 = arith.mulf %32, %32 : vector<16x1x256xf32>
    %39 = arith.subf %37, %38 : vector<16x1x256xf32>
    %cst_17 = arith.constant 0.000000e+00 : f32
    %40 = vector.broadcast %cst_17 : f32 to vector<16x1x256xf32>
    %41 = arith.maximumf %39, %40 : vector<16x1x256xf32>
    %42 = vector.broadcast %32 : vector<16x1x256xf32> to vector<16x8x256xf32>
    %43 = arith.subf %28, %42 : vector<16x8x256xf32>
    %cst_18 = arith.constant 9.99999974E-6 : f32
    %44 = vector.broadcast %cst_18 : f32 to vector<16x1x256xf32>
    %45 = arith.addf %41, %44 : vector<16x1x256xf32>
    %46 = math.rsqrt %45 : vector<16x1x256xf32>
    %47 = vector.broadcast %46 : vector<16x1x256xf32> to vector<16x8x256xf32>
    %48 = arith.mulf %43, %47 : vector<16x8x256xf32>
    %49 = vector.shape_cast %48 : vector<16x8x256xf32> to vector<128x256xf32>
    %c0_19 = arith.constant 0 : index
    %c0_20 = arith.constant 0 : index
    %50 = vector.load %arg4[%c0_19, %c0_20] : memref<256x128xf32, #tpu.memory_space<vmem>>, vector<256x128xf32>
    %cst_21 = arith.constant dense<0.000000e+00> : vector<128x128xf32>
    %51 = tpu.matmul %49, %50, %cst_21 {dimension_numbers = #tpu.dot_dimension_numbers<[1], [0], [0], [1], [0, 0, 1, 1], [], []>} : vector<128x256xf32>, vector<256x128xf32>, vector<128x128xf32> -> vector<128x128xf32>
    %c0_22 = arith.constant 0 : index
    %c0_23 = arith.constant 0 : index
    %52 = vector.load %arg5[%c0_22, %c0_23] : memref<1x128xf32, #tpu.memory_space<vmem>>, vector<1x128xf32>
    %53 = vector.broadcast %52 : vector<1x128xf32> to vector<128x128xf32>
    %54 = arith.addf %51, %53 : vector<128x128xf32>
    %55 = vector.shape_cast %54 : vector<128x128xf32> to vector<16x8x128xf32>
    %c0_24 = arith.constant 0 : index
    %c0_25 = arith.constant 0 : index
    %c0_26 = arith.constant 0 : index
    %56 = vector.load %arg6[%c0_24, %c0_25, %c0_26] : memref<16x8x128xf32, #tpu.memory_space<vmem>>, vector<16x8x128xf32>
    tpu.vector_store %arg6[%c0_24, %c0_25, %c0_26], %55 {strides = array<i32>} : memref<16x8x128xf32, #tpu.memory_space<vmem>>, vector<16x8x128xf32>,
    return
  }
  func.func @transform_0(%arg0: i32) -> (i32, i32, i32) {
    %c0_i32 = arith.constant 0 : i32
    %c0_i32_0 = arith.constant 0 : i32
    %c0_i32_1 = arith.constant 0 : i32
    return %arg0, %c0_i32, %c0_i32_0 : i32, i32, i32
  }
  func.func @transform_1(%arg0: i32) -> (i32, i32) {
    %c0_i32 = arith.constant 0 : i32
    %c0_i32_0 = arith.constant 0 : i32
    %c0_i32_1 = arith.constant 0 : i32
    return %c0_i32, %c0_i32_0 : i32, i32
  }
  func.func @transform_2(%arg0: i32) -> (i32, i32) {
    %c0_i32 = arith.constant 0 : i32
    %c0_i32_0 = arith.constant 0 : i32
    %c0_i32_1 = arith.constant 0 : i32
    return %c0_i32, %c0_i32_0 : i32, i32
  }
  func.func @transform_3(%arg0: i32) -> (i32, i32) {
    %c0_i32 = arith.constant 0 : i32
    %c0_i32_0 = arith.constant 0 : i32
    %c0_i32_1 = arith.constant 0 : i32
    return %c0_i32, %c0_i32_0 : i32, i32
  }
  func.func @transform_4(%arg0: i32) -> (i32, i32) {
    %c0_i32 = arith.constant 0 : i32
    %c0_i32_0 = arith.constant 0 : i32
    %c0_i32_1 = arith.constant 0 : i32
    return %c0_i32, %c0_i32_0 : i32, i32
  }
  func.func @transform_5(%arg0: i32) -> (i32, i32, i32) {
    %c0_i32 = arith.constant 0 : i32
    %c0_i32_0 = arith.constant 0 : i32
    %c0_i32_1 = arith.constant 0 : i32
    return %arg0, %c0_i32, %c0_i32_0 : i32, i32, i32
  }
}

</mosaic_0001>

<llo_original>
// kernel: tpu_custom_call.1
$region0: #{tpu_custom_call.1}
  #allocation0 [shape = 'u32[]', space=smem, size = 0x4, offset = 0x4, fixed_abs, tag = 'smem constant byte address 0x4 - core index']
  #allocation1 [shape = 'u32[144,128]{1,0:T(1,128)}', space=vmem, size = 0x12000, scoped, tag = 'internal scratch']
  %s0 = inlined_call_operand.hbm [shape: f32[32,8,128], index: 0, kind: input, shape index: {}]
  %s1 = inlined_call_operand.hbm [shape: f32[128,128], index: 1, kind: input, shape index: {}]
  %s2 = inlined_call_operand.hbm [shape: f32[128,256], index: 2, kind: input, shape index: {}]
  %s3 = inlined_call_operand.hbm [shape: f32[256,128], index: 3, kind: input, shape index: {}]
  %s4 = inlined_call_operand.vmem [shape: f32[1,128], index: 4, kind: input, shape index: {}]
  %s5 = inlined_call_operand.hbm [shape: f32[32,8,128], index: 5, kind: output, shape index: {}]
  %s6 = sld [smem:[#allocation0]]
  $region69: #{tpu_custom_call.1} parent=0
    _
  %s8 = ssub.s32 1, %s6
  %s9 = scalar_select 0, %s8, %s6
  $region1: #{tpu_custom_call.1} parent=0
    #allocation2 [shape = 'u8[131072]{0}', space=vmem, size = 0x20000, scoped, tag = 'input window, operand 0']
    #allocation3 [shape = 's32[2]{0}', space=sflag, size = 0x8, scoped, tag = 'scoped memory for tpu_custom_call.1']
    #allocation4 [shape = 's32[2]{0}', space=sflag, size = 0x8, scoped, tag = 'scoped memory for tpu_custom_call.1']
    #allocation5 [shape = 'u8[65536]{0}', space=vmem, size = 0x10000, scoped, tag = 'input window, operand 1, single buffered']
    #allocation6 [shape = 's32[1]{0}', space=sflag, size = 0x4, scoped, tag = 'scoped memory for tpu_custom_call.1']
    #allocation7 [shape = 'u8[131072]{0}', space=vmem, size = 0x20000, scoped, tag = 'input window, operand 2, single buffered']
    #allocation8 [shape = 'u8[131072]{0}', space=vmem, size = 0x20000, scoped, tag = 'input window, operand 3, single buffered']
    #allocation9 [shape = 's32[1]{0}', space=sflag, size = 0x4, scoped, tag = 'scoped memory for tpu_custom_call.1']
    #allocation10 [shape = 'u8[131072]{0}', space=vmem, size = 0x20000, scoped, tag = 'output window, operand 0']
    %10 = vsyncpa [#allocation3], 0
    %s11 = scalar_lea.sflag [#allocation3], 1
    %12 = vsyncpa %s11, 0
    %13 = vsyncpa [#allocation6], 0
    %14 = vsyncpa [#allocation9], 0
    %15 = vsyncpa [#allocation4], 0
    %s16 = scalar_lea.sflag [#allocation4], 1
    %17 = vsyncpa %s16, 0
    loop: start=0, step=1, limit=4
    $region2: #{tpu_custom_call.1} parent=1 // loop_pre_header
      _
    $region3: #{tpu_custom_call.1} parent=1 // loop_header
      %s19 = sphi 0, %s23
      %p20 = scmp.ge.s32.totalorder %s19, 4
      %s29 = sphi 0, %s31
      %s32 = sphi 0, %s29
      %s33 = sphi 0, %s32
      %s49 = sphi 0, %s33
      %s53 = sphi 0, %s53
      %s55 = sphi 0, %s53
      %s56 = sphi 0, %s55
      %s70 = sphi 0, %s56
      %s74 = sphi 0, %s74
      %s76 = sphi 0, %s74
      %s77 = sphi 0, %s76
      %s91 = sphi 0, %s77
      %s95 = sphi 0, %s95
      %s97 = sphi 0, %s95
      %s98 = sphi 0, %s97
      %s112 = sphi 0, %s98
      %s116 = sphi 0, %s116
      %s118 = sphi 0, %s116
      %s119 = sphi 0, %s118
      %s133 = sphi 0, %s119
      %s139 = sphi 0, %s141
      %s142 = sphi 0, %s139
      %s143 = sphi 0, %s142
      %s159 = sphi 0, %s143
    $region4: #{tpu_custom_call.1} parent=1 // loop_header_branch
      %22 = sbr.rel (%p20) target = $region8
    $region5: #{tpu_custom_call.1} parent=1 // loop_body
      %s24 = ssub.s32 %s19, 1
      %s25 = ssub.s32 %s19, 2
      %s26 = sadd.s32 %s19, 1
      %s27 = ssub.s32 %s19, %s26
      %p28 = scmp.eq.s32.totalorder %s27, 0
      %s30 = sadd.s32 %s29, 1
      %s31 = scalar_select %p28, %s29, %s30
      %p34 = pneg %p28
      %p35 = scmp.eq.s32.totalorder %s19, 1
      %p36 = por %p34, %p35
      %p37 = scmp.ne.s32.totalorder %s29, %s32
      %p38 = scmp.eq.s32.totalorder %s19, 0
      %p39 = por %p37, %p38
      %p40 = scmp.ne.s32.totalorder %s29, %s32
      %p41 = scmp.eq.s32.totalorder %s24, 1
      %p42 = por %p40, %p41
      %p43 = scmp.ne.s32.totalorder %s32, %s33
      %p44 = scmp.eq.s32.totalorder %s24, 0
      %p45 = por %p43, %p44
      %p46 = scmp.ne.s32.totalorder %s32, %s33
      %p47 = scmp.eq.s32.totalorder %s25, 1
      %p48 = por %p46, %p47
      %p50 = scmp.ne.s32.totalorder %s33, %s49
      %p51 = scmp.eq.s32.totalorder %s25, 0
      %p52 = por %p50, %p51
      %s54 = sadd.s32 %s53, 1
      %p57 = scmp.eq.s32.totalorder %s19, 1
      %p58 = scmp.ne.s32.totalorder %s53, %s55
      %p59 = scmp.eq.s32.totalorder %s19, 0
      %p60 = por %p58, %p59
      %p61 = scmp.ne.s32.totalorder %s53, %s55
      %p62 = scmp.eq.s32.totalorder %s24, 1
      %p63 = por %p61, %p62
      %p64 = scmp.ne.s32.totalorder %s55, %s56
      %p65 = scmp.eq.s32.totalorder %s24, 0
      %p66 = por %p64, %p65
      %p67 = scmp.ne.s32.totalorder %s55, %s56
      %p68 = scmp.eq.s32.totalorder %s25, 1
      %p69 = por %p67, %p68
      %p71 = scmp.ne.s32.totalorder %s56, %s70
      %p72 = scmp.eq.s32.totalorder %s25, 0
      %p73 = por %p71, %p72
      %s75 = sadd.s32 %s74, 1
      %p78 = scmp.eq.s32.totalorder %s19, 1
      %p79 = scmp.ne.s32.totalorder %s74, %s76
      %p80 = scmp.eq.s32.totalorder %s19, 0
      %p81 = por %p79, %p80
      %p82 = scmp.ne.s32.totalorder %s74, %s76
      %p83 = scmp.eq.s32.totalorder %s24, 1
      %p84 = por %p82, %p83
      %p85 = scmp.ne.s32.totalorder %s76, %s77
      %p86 = scmp.eq.s32.totalorder %s24, 0
      %p87 = por %p85, %p86
      %p88 = scmp.ne.s32.totalorder %s76, %s77
      %p89 = scmp.eq.s32.totalorder %s25, 1
      %p90 = por %p88, %p89
      %p92 = scmp.ne.s32.totalorder %s77, %s91
      %p93 = scmp.eq.s32.totalorder %s25, 0
      %p94 = por %p92, %p93
      %s96 = sadd.s32 %s95, 1
      %p99 = scmp.eq.s32.totalorder %s19, 1
      %p100 = scmp.ne.s32.totalorder %s95, %s97
      %p101 = scmp.eq.s32.totalorder %s19, 0
      %p102 = por %p100, %p101
      %p103 = scmp.ne.s32.totalorder %s95, %s97
      %p104 = scmp.eq.s32.totalorder %s24, 1
      %p105 = por %p103, %p104
      %p106 = scmp.ne.s32.totalorder %s97, %s98
      %p107 = scmp.eq.s32.totalorder %s24, 0
      %p108 = por %p106, %p107
      %p109 = scmp.ne.s32.totalorder %s97, %s98
      %p110 = scmp.eq.s32.totalorder %s25, 1
      %p111 = por %p109, %p110
      %p113 = scmp.ne.s32.totalorder %s98, %s112
      %p114 = scmp.eq.s32.totalorder %s25, 0
      %p115 = por %p113, %p114
      %s117 = sadd.s32 %s116, 1
      %p120 = scmp.eq.s32.totalorder %s19, 1
      %p121 = scmp.ne.s32.totalorder %s116, %s118
      %p122 = scmp.eq.s32.totalorder %s19, 0
      %p123 = por %p121, %p122
      %p124 = scmp.ne.s32.totalorder %s116, %s118
      %p125 = scmp.eq.s32.totalorder %s24, 1
      %p126 = por %p124, %p125
      %p127 = scmp.ne.s32.totalorder %s118, %s119
      %p128 = scmp.eq.s32.totalorder %s24, 0
      %p129 = por %p127, %p128
      %p130 = scmp.ne.s32.totalorder %s118, %s119
      %p131 = scmp.eq.s32.totalorder %s25, 1
      %p132 = por %p130, %p131
      %p134 = scmp.ne.s32.totalorder %s119, %s133
      %p135 = scmp.eq.s32.totalorder %s25, 0
      %p136 = por %p134, %p135
      %s137 = ssub.s32 %s19, %s26
      %p138 = scmp.eq.s32.totalorder %s137, 0
      %s140 = sadd.s32 %s139, 1
      %s141 = scalar_select %p138, %s139, %s140
      %p144 = pneg %p138
      %p145 = scmp.eq.s32.totalorder %s19, 1
      %p146 = por %p144, %p145
      %p147 = scmp.ne.s32.totalorder %s139, %s142
      %p148 = scmp.eq.s32.totalorder %s19, 0
      %p149 = por %p147, %p148
      %p150 = scmp.ne.s32.totalorder %s139, %s142
      %p151 = scmp.eq.s32.totalorder %s24, 1
      %p152 = por %p150, %p151
      %p153 = scmp.ne.s32.totalorder %s142, %s143
      %p154 = scmp.eq.s32.totalorder %s24, 0
      %p155 = por %p153, %p154
      %p156 = scmp.ne.s32.totalorder %s142, %s143
      %p157 = scmp.eq.s32.totalorder %s25, 1
      %p158 = por %p156, %p157
      %p160 = scmp.ne.s32.totalorder %s143, %s159
      %p161 = scmp.eq.s32.totalorder %s25, 0
      %p162 = por %p160, %p161
      %p163 = scmp.le.s32.totalorder 1, %s19
      %p164 = scmp.lt.s32.totalorder %s19, 3
      %p165 = pnand %p163, %p164
      %p166 = pneg %p165
      // Predicated region
      $region9: #{tpu_custom_call.1} parent=5 // pred_check
        _
      $region10: #{tpu_custom_call.1} parent=5 // pred_check_branch
        %168 = sbr.rel (%p165) target = $region12
      $region11: #{tpu_custom_call.1} parent=5 // pred_region
        %s169 = ssub.s32 %s19, 1
        // Predicated region
        $region13: #{tpu_custom_call.1} parent=11 // pred_check
          %p170 = pneg %p66
        $region14: #{tpu_custom_call.1} parent=11 // pred_check_branch
          %172 = sbr.rel (%p170) target = $region16
        $region15: #{tpu_custom_call.1} parent=11 // pred_region
          %s174 = ssub.s32 2048, 2048
          %175 = vsyncadd [#allocation6], %s174
          %s176 = sshll.u32 [#allocation5], 4
          %s177 = int_to_ptr.vmem [resolvable:$true] %s176
          %182 = dma.hbm_to_vmem [thread:$0]  %s1, 2048, %s177, [#allocation6], 128, 128, 8
        $region16: #{tpu_custom_call.1} parent=11 // pred_fallthru
          _
        // Predicated region
        $region17: #{tpu_custom_call.1} parent=11 // pred_check
          %p183 = pneg %p87
        $region18: #{tpu_custom_call.1} parent=11 // pred_check_branch
          %185 = sbr.rel (%p183) target = $region20
        $region19: #{tpu_custom_call.1} parent=11 // pred_region
          %s187 = ssub.s32 4096, 4096
          %188 = vsyncadd [#allocation6], %s187
          %s189 = sshll.u32 [#allocation7], 4
          %s190 = int_to_ptr.vmem [resolvable:$true] %s189
          %195 = dma.hbm_to_vmem [thread:$0]  %s2, 4096, %s190, [#allocation6], 256, 256, 16
        $region20: #{tpu_custom_call.1} parent=11 // pred_fallthru
          _
        // Predicated region
        $region21: #{tpu_custom_call.1} parent=11 // pred_check
          %p196 = pneg %p108
        $region22: #{tpu_custom_call.1} parent=11 // pred_check_branch
          %198 = sbr.rel (%p196) target = $region24
        $region23: #{tpu_custom_call.1} parent=11 // pred_region
          %s200 = ssub.s32 4096, 4096
          %201 = vsyncadd [#allocation9], %s200
          %s202 = sshll.u32 [#allocation8], 4
          %s203 = int_to_ptr.vmem [resolvable:$true] %s202
          %208 = dma.hbm_to_vmem [thread:$0]  %s3, 4096, %s203, [#allocation9], 128, 128, 8
        $region24: #{tpu_custom_call.1} parent=11 // pred_fallthru
          _
        // Predicated region
        $region25: #{tpu_custom_call.1} parent=11 // pred_check
          %p209 = pneg %p129
        $region26: #{tpu_custom_call.1} parent=11 // pred_check_branch
          %211 = sbr.rel (%p209) target = $region28
        $region27: #{tpu_custom_call.1} parent=11 // pred_region
          _
        $region28: #{tpu_custom_call.1} parent=11 // pred_fallthru
          _
      $region12: #{tpu_custom_call.1} parent=5 // pred_fallthru
        _
      %p212 = scmp.lt.s32.totalorder %s19, 2
      // Predicated region
      $region29: #{tpu_custom_call.1} parent=5 // pred_check
        %p213 = pneg %p212
      $region30: #{tpu_custom_call.1} parent=5 // pred_check_branch
        %215 = sbr.rel (%p213) target = $region32
      $region31: #{tpu_custom_call.1} parent=5 // pred_region
        // Predicated region
        $region33: #{tpu_custom_call.1} parent=31 // pred_check
          %p216 = pneg %p39
        $region34: #{tpu_custom_call.1} parent=31 // pred_check_branch
          %218 = sbr.rel (%p216) target = $region36
        $region35: #{tpu_custom_call.1} parent=31 // pred_region
          %s219 = sand.u32 %s29, 1
          %s220 = scalar_lea.sflag [#allocation3], %s219
          %s221 = sand.u32 %s29, 1
          %s222 = smul.addr %s221, 128
          %s223 = scalar_lea.vmem [#allocation2], %s222
          %s224 = smul.u32 16, %s19
          %s226 = ssub.s32 2048, 2048
          %227 = vsyncadd %s220, %s226
          %s228 = smul.addr %s224, 128
          %s229 = scalar_lea.hbm %s0, %s228
          %s230 = sshll.u32 %s223, 4
          %s231 = int_to_ptr.vmem [resolvable:$true] %s230
          %236 = dma.hbm_to_vmem [thread:$0]  %s229, 2048, %s231, %s220, 128, 128, 8
        $region36: #{tpu_custom_call.1} parent=31 // pred_fallthru
          _
      $region32: #{tpu_custom_call.1} parent=5 // pred_fallthru
        _
      %p237 = scmp.le.s32.totalorder 1, %s19
      %p238 = scmp.lt.s32.totalorder %s19, 3
      %p239 = pnand %p237, %p238
      %p240 = pneg %p239
      // Predicated region
      $region37: #{tpu_custom_call.1} parent=5 // pred_check
        _
      $region38: #{tpu_custom_call.1} parent=5 // pred_check_branch
        %242 = sbr.rel (%p239) target = $region40
      $region39: #{tpu_custom_call.1} parent=5 // pred_region
        %s243 = ssub.s32 %s19, 1
        %s244 = sand.u32 %s32, 1
        %s245 = scalar_lea.sflag [#allocation3], %s244
        %s246 = sand.u32 %s32, 1
        %s247 = smul.addr %s246, 128
        %s248 = scalar_lea.vmem [#allocation2], %s247
        // Predicated region
        $region41: #{tpu_custom_call.1} parent=39 // pred_check
          %p249 = pneg %p45
        $region42: #{tpu_custom_call.1} parent=39 // pred_check_branch
          %251 = sbr.rel (%p249) target = $region44
        $region43: #{tpu_custom_call.1} parent=39 // pred_region
          %252 = dma.done %s245, 2048
        $region44: #{tpu_custom_call.1} parent=39 // pred_fallthru
          _
        // Predicated region
        $region45: #{tpu_custom_call.1} parent=39 // pred_check
          %p253 = pneg %p66
        $region46: #{tpu_custom_call.1} parent=39 // pred_check_branch
          %255 = sbr.rel (%p253) target = $region48
        $region47: #{tpu_custom_call.1} parent=39 // pred_region
          %256 = dma.done [#allocation6], 2048
        $region48: #{tpu_custom_call.1} parent=39 // pred_fallthru
          _
        // Predicated region
        $region49: #{tpu_custom_call.1} parent=39 // pred_check
          %p257 = pneg %p87
        $region50: #{tpu_custom_call.1} parent=39 // pred_check_branch
          %259 = sbr.rel (%p257) target = $region52
        $region51: #{tpu_custom_call.1} parent=39 // pred_region
          %260 = dma.done [#allocation6], 4096
        $region52: #{tpu_custom_call.1} parent=39 // pred_fallthru
          _
        // Predicated region
        $region53: #{tpu_custom_call.1} parent=39 // pred_check
          %p261 = pneg %p108
        $region54: #{tpu_custom_call.1} parent=39 // pred_check_branch
          %263 = sbr.rel (%p261) target = $region56
        $region55: #{tpu_custom_call.1} parent=39 // pred_region
          %264 = dma.done [#allocation9], 4096
        $region56: #{tpu_custom_call.1} parent=39 // pred_fallthru
          _
        %s265 = sand.u32 %s32, 1
        %s266 = scalar_lea.sflag [#allocation3], %s265
        %s267 = sand.u32 %s32, 1
        %s268 = smul.addr %s267, 128
        %s269 = scalar_lea.vmem [#allocation2], %s268
        %p270 = pneg %p45
        %p271 = pneg %p42
        %p272 = pneg %p66
        %p273 = pneg %p63
        %p274 = pneg %p87
        %p275 = pneg %p84
        %p276 = pneg %p108
        %p277 = pneg %p105
        %p278 = pneg %p129
        %p279 = pneg %p126
        %p280 = pneg %p155
        %p281 = pneg %p152
        %s282 = sand.u32 %s142, 1
        %s283 = scalar_lea.sflag [#allocation4], %s282
        %s284 = sand.u32 %s142, 1
        %s285 = smul.addr %s284, 128
        %s286 = scalar_lea.vmem [#allocation10], %s285
        %s287 = smul.u32 16, %s24
        %s288 = smul.u32 16, %s24
        %v289 = vld [vmem:[%s248] sm:$0xff]
        %v290 = vld [vmem:[%s248 + $0x8] sm:$0xff]
        %v291 = vld [vmem:[%s248 + $0x10] sm:$0xff]
        %v292 = vld [vmem:[%s248 + $0x18] sm:$0xff]
        %v293 = vld [vmem:[%s248 + $0x20] sm:$0xff]
        %v294 = vld [vmem:[%s248 + $0x28] sm:$0xff]
        %v295 = vld [vmem:[%s248 + $0x30] sm:$0xff]
        %v296 = vld [vmem:[%s248 + $0x38] sm:$0xff]
        %v297 = vld [vmem:[%s248 + $0x40] sm:$0xff]
        %v298 = vld [vmem:[%s248 + $0x48] sm:$0xff]
        %v299 = vld [vmem:[%s248 + $0x50] sm:$0xff]
        %v300 = vld [vmem:[%s248 + $0x58] sm:$0xff]
        %v301 = vld [vmem:[%s248 + $0x60] sm:$0xff]
        %v302 = vld [vmem:[%s248 + $0x68] sm:$0xff]
        %v303 = vld [vmem:[%s248 + $0x70] sm:$0xff]
        %v304 = vld [vmem:[%s248 + $0x78] sm:$0xff]
        %v305 = vld [vmem:[#allocation5] sm:$0xff]
        %v306 = vld [vmem:[#allocation5 + $0x8] sm:$0xff]
        %v307 = vld [vmem:[#allocation5 + $0x10] sm:$0xff]
        %v308 = vld [vmem:[#allocation5 + $0x18] sm:$0xff]
        %v309 = vld [vmem:[#allocation5 + $0x20] sm:$0xff]
        %v310 = vld [vmem:[#allocation5 + $0x28] sm:$0xff]
        %v311 = vld [vmem:[#allocation5 + $0x30] sm:$0xff]
        %v312 = vld [vmem:[#allocation5 + $0x38] sm:$0xff]
        %v313 = vld [vmem:[#allocation5 + $0x40] sm:$0xff]
        %v314 = vld [vmem:[#allocation5 + $0x48] sm:$0xff]
        %v315 = vld [vmem:[#allocation5 + $0x50] sm:$0xff]
        %v316 = vld [vmem:[#allocation5 + $0x58] sm:$0xff]
        %v317 = vld [vmem:[#allocation5 + $0x60] sm:$0xff]
        %v318 = vld [vmem:[#allocation5 + $0x68] sm:$0xff]
        %v319 = vld [vmem:[#allocation5 + $0x70] sm:$0xff]
        %v320 = vld [vmem:[#allocation5 + $0x78] sm:$0xff]
        %321 = vmatprep.subr.mxu0 0.0
        %322 = vmatpush1.msra.mxu0 %v320
        %323 = vmatprep.subr.mxu0 0.0
        %324 = vmatpush1.msra.mxu0 %v319
        %325 = vmatprep.subr.mxu0 0.0
        %326 = vmatpush1.msra.mxu0 %v318
        %327 = vmatprep.subr.mxu0 0.0
        %328 = vmatpush1.msra.mxu0 %v317
        %329 = vmatprep.subr.mxu0 0.0
        %330 = vmatpush1.msra.mxu0 %v316
        %331 = vmatprep.subr.mxu0 0.0
        %332 = vmatpush1.msra.mxu0 %v315
        %333 = vmatprep.subr.mxu0 0.0
        %334 = vmatpush1.msra.mxu0 %v314
        %335 = vmatprep.subr.mxu0 0.0
        %336 = vmatpush1.msra.mxu0 %v313
        %337 = vmatprep.subr.mxu0 0.0
        %338 = vmatpush1.msra.mxu0 %v312
        %339 = vmatprep.subr.mxu0 0.0
        %340 = vmatpush1.msra.mxu0 %v311
        %341 = vmatprep.subr.mxu0 0.0
        %342 = vmatpush1.msra.mxu0 %v310
        %343 = vmatprep.subr.mxu0 0.0
        %344 = vmatpush1.msra.mxu0 %v309
        %345 = vmatprep.subr.mxu0 0.0
        %346 = vmatpush1.msra.mxu0 %v308
        %347 = vmatprep.subr.mxu0 0.0
        %348 = vmatpush1.msra.mxu0 %v307
        %349 = vmatprep.subr.mxu0 0.0
        %350 = vmatpush1.msra.mxu0 %v306
        %351 = vmatprep.subr.mxu0 0.0
        %352 = vmatpush1.msra.mxu0 %v305
        %353 = vmatprep.subr.mxu0 0.0
        %354 = vmatpush2.msra.mxu0 0.0
        %355 = vmatprep.subr.mxu0 0.0
        %356 = vmatpush2.msra.mxu0 0.0
        %357 = vmatprep.subr.mxu0 0.0
        %358 = vmatpush2.msra.mxu0 0.0
        %359 = vmatprep.subr.mxu0 0.0
        %360 = vmatpush2.msra.mxu0 0.0
        %361 = vmatprep.subr.mxu0 0.0
        %362 = vmatpush2.msra.mxu0 0.0
        %363 = vmatprep.subr.mxu0 0.0
        %364 = vmatpush2.msra.mxu0 0.0
        %365 = vmatprep.subr.mxu0 0.0
        %366 = vmatpush2.msra.mxu0 0.0
        %367 = vmatprep.subr.mxu0 0.0
        %368 = vmatpush2.msra.mxu0 0.0
        %369 = vmatprep.subr.mxu0 0.0
        %370 = vmatpush2.msra.mxu0 0.0
        %371 = vmatprep.subr.mxu0 0.0
        %372 = vmatpush2.msra.mxu0 0.0
        %373 = vmatprep.subr.mxu0 0.0
        %374 = vmatpush2.msra.mxu0 0.0
        %375 = vmatprep.subr.mxu0 0.0
        %376 = vmatpush2.msra.mxu0 0.0
        %377 = vmatprep.subr.mxu0 0.0
        %378 = vmatpush2.msra.mxu0 0.0
        %379 = vmatprep.subr.mxu0 0.0
        %380 = vmatpush2.msra.mxu0 0.0
        %381 = vmatprep.subr.mxu0 0.0
        %382 = vmatpush2.msra.mxu0 0.0
        %383 = vmatprep.subr.mxu0 0.0
        %384 = vmatpush2.msra.mxu0 0.0
        %385 = vmatprep.mubr.f32.mxu0 0.0
        %386 = vmatmul.mubr.f32.gmra.mxu0 %v289
        %v387 = vpop.f32.mrf.mxu0
        %v388 = vadd.f32 0.0, %v387
        %v389 = vpop.f32.mrf.mxu0
        %390 = vmatprep.mubr.f32.mxu0 0.0
        %391 = vmatmul.mubr.f32.gmra.mxu0 %v290
        %v392 = vpop.f32.mrf.mxu0
        %v393 = vadd.f32 0.0, %v392
        %v394 = vpop.f32.mrf.mxu0
        %395 = vmatprep.mubr.f32.mxu0 0.0
        %396 = vmatmul.mubr.f32.gmra.mxu0 %v291
        %v397 = vpop.f32.mrf.mxu0
        %v398 = vadd.f32 0.0, %v397
        %v399 = vpop.f32.mrf.mxu0
        %400 = vmatprep.mubr.f32.mxu0 0.0
        %401 = vmatmul.mubr.f32.gmra.mxu0 %v292
        %v402 = vpop.f32.mrf.mxu0
        %v403 = vadd.f32 0.0, %v402
        %v404 = vpop.f32.mrf.mxu0
        %405 = vmatprep.mubr.f32.mxu0 0.0
        %406 = vmatmul.mubr.f32.gmra.mxu0 %v293
        %v407 = vpop.f32.mrf.mxu0
        %v408 = vadd.f32 0.0, %v407
        %v409 = vpop.f32.mrf.mxu0
        %410 = vmatprep.mubr.f32.mxu0 0.0
        %411 = vmatmul.mubr.f32.gmra.mxu0 %v294
        %v412 = vpop.f32.mrf.mxu0
        %v413 = vadd.f32 0.0, %v412
        %v414 = vpop.f32.mrf.mxu0
        %415 = vmatprep.mubr.f32.mxu0 0.0
        %416 = vmatmul.mubr.f32.gmra.mxu0 %v295
        %v417 = vpop.f32.mrf.mxu0
        %v418 = vadd.f32 0.0, %v417
        %v419 = vpop.f32.mrf.mxu0
        %420 = vmatprep.mubr.f32.mxu0 0.0
        %421 = vmatmul.mubr.f32.gmra.mxu0 %v296
        %v422 = vpop.f32.mrf.mxu0
        %v423 = vadd.f32 0.0, %v422
        %v424 = vpop.f32.mrf.mxu0
        %425 = vmatprep.mubr.f32.mxu0 0.0
        %426 = vmatmul.mubr.f32.gmra.mxu0 %v297
        %v427 = vpop.f32.mrf.mxu0
        %v428 = vadd.f32 0.0, %v427
        %v429 = vpop.f32.mrf.mxu0
        %430 = vmatprep.mubr.f32.mxu0 0.0
        %431 = vmatmul.mubr.f32.gmra.mxu0 %v298
        %v432 = vpop.f32.mrf.mxu0
        %v433 = vadd.f32 0.0, %v432
        %v434 = vpop.f32.mrf.mxu0
        %435 = vmatprep.mubr.f32.mxu0 0.0
        %436 = vmatmul.mubr.f32.gmra.mxu0 %v299
        %v437 = vpop.f32.mrf.mxu0
        %v438 = vadd.f32 0.0, %v437
        %v439 = vpop.f32.mrf.mxu0
        %440 = vmatprep.mubr.f32.mxu0 0.0
        %441 = vmatmul.mubr.f32.gmra.mxu0 %v300
        %v442 = vpop.f32.mrf.mxu0
        %v443 = vadd.f32 0.0, %v442
        %v444 = vpop.f32.mrf.mxu0
        %445 = vmatprep.mubr.f32.mxu0 0.0
        %446 = vmatmul.mubr.f32.gmra.mxu0 %v301
        %v447 = vpop.f32.mrf.mxu0
        %v448 = vadd.f32 0.0, %v447
        %v449 = vpop.f32.mrf.mxu0
        %450 = vmatprep.mubr.f32.mxu0 0.0
        %451 = vmatmul.mubr.f32.gmra.mxu0 %v302
        %v452 = vpop.f32.mrf.mxu0
        %v453 = vadd.f32 0.0, %v452
        %v454 = vpop.f32.mrf.mxu0
        %455 = vmatprep.mubr.f32.mxu0 0.0
        %456 = vmatmul.mubr.f32.gmra.mxu0 %v303
        %v457 = vpop.f32.mrf.mxu0
        %v458 = vadd.f32 0.0, %v457
        %v459 = vpop.f32.mrf.mxu0
        %460 = vmatprep.mubr.f32.mxu0 0.0
        %461 = vmatmul.mubr.f32.gmra.mxu0 %v304
        %v462 = vpop.f32.mrf.mxu0
        %v463 = vadd.f32 0.0, %v462
        %v464 = vpop.f32.mrf.mxu0
        %465 = vdwg.mxu0
        %v466 = vrot.slane %v388, 4
        %v467 = vadd.f32 %v388, %v466
        %v468 = vrot.slane %v467, 2
        %v469 = vadd.f32 %v467, %v468
        %v470 = vrot.slane %v469, 1
        %v471 = vadd.f32 %v469, %v470
        %v472 = vrot.slane %v393, 4
        %v473 = vadd.f32 %v393, %v472
        %v474 = vrot.slane %v473, 2
        %v475 = vadd.f32 %v473, %v474
        %v476 = vrot.slane %v475, 1
        %v477 = vadd.f32 %v475, %v476
        %v478 = vrot.slane %v398, 4
        %v479 = vadd.f32 %v398, %v478
        %v480 = vrot.slane %v479, 2
        %v481 = vadd.f32 %v479, %v480
        %v482 = vrot.slane %v481, 1
        %v483 = vadd.f32 %v481, %v482
        %v484 = vrot.slane %v403, 4
        %v485 = vadd.f32 %v403, %v484
        %v486 = vrot.slane %v485, 2
        %v487 = vadd.f32 %v485, %v486
        %v488 = vrot.slane %v487, 1
        %v489 = vadd.f32 %v487, %v488
        %v490 = vrot.slane %v408, 4
        %v491 = vadd.f32 %v408, %v490
        %v492 = vrot.slane %v491, 2
        %v493 = vadd.f32 %v491, %v492
        %v494 = vrot.slane %v493, 1
        %v495 = vadd.f32 %v493, %v494
        %v496 = vrot.slane %v413, 4
        %v497 = vadd.f32 %v413, %v496
        %v498 = vrot.slane %v497, 2
        %v499 = vadd.f32 %v497, %v498
        %v500 = vrot.slane %v499, 1
        %v501 = vadd.f32 %v499, %v500
        %v502 = vrot.slane %v418, 4
        %v503 = vadd.f32 %v418, %v502
        %v504 = vrot.slane %v503, 2
        %v505 = vadd.f32 %v503, %v504
        %v506 = vrot.slane %v505, 1
        %v507 = vadd.f32 %v505, %v506
        %v508 = vrot.slane %v423, 4
        %v509 = vadd.f32 %v423, %v508
        %v510 = vrot.slane %v509, 2
        %v511 = vadd.f32 %v509, %v510
        %v512 = vrot.slane %v511, 1
        %v513 = vadd.f32 %v511, %v512
        %v514 = vrot.slane %v428, 4
        %v515 = vadd.f32 %v428, %v514
        %v516 = vrot.slane %v515, 2
        %v517 = vadd.f32 %v515, %v516
        %v518 = vrot.slane %v517, 1
        %v519 = vadd.f32 %v517, %v518
        %v520 = vrot.slane %v433, 4
        %v521 = vadd.f32 %v433, %v520
        %v522 = vrot.slane %v521, 2
        %v523 = vadd.f32 %v521, %v522
        %v524 = vrot.slane %v523, 1
        %v525 = vadd.f32 %v523, %v524
        %v526 = vrot.slane %v438, 4
        %v527 = vadd.f32 %v438, %v526
        %v528 = vrot.slane %v527, 2
        %v529 = vadd.f32 %v527, %v528
        %v530 = vrot.slane %v529, 1
        %v531 = vadd.f32 %v529, %v530
        %v532 = vrot.slane %v443, 4
        %v533 = vadd.f32 %v443, %v532
        %v534 = vrot.slane %v533, 2
        %v535 = vadd.f32 %v533, %v534
        %v536 = vrot.slane %v535, 1
        %v537 = vadd.f32 %v535, %v536
        %v538 = vrot.slane %v448, 4
        %v539 = vadd.f32 %v448, %v538
        %v540 = vrot.slane %v539, 2
        %v541 = vadd.f32 %v539, %v540
        %v542 = vrot.slane %v541, 1
        %v543 = vadd.f32 %v541, %v542
        %v544 = vrot.slane %v453, 4
        %v545 = vadd.f32 %v453, %v544
        %v546 = vrot.slane %v545, 2
        %v547 = vadd.f32 %v545, %v546
        %v548 = vrot.slane %v547, 1
        %v549 = vadd.f32 %v547, %v548
        %v550 = vrot.slane %v458, 4
        %v551 = vadd.f32 %v458, %v550
        %v552 = vrot.slane %v551, 2
        %v553 = vadd.f32 %v551, %v552
        %v554 = vrot.slane %v553, 1
        %v555 = vadd.f32 %v553, %v554
        %v556 = vrot.slane %v463, 4
        %v557 = vadd.f32 %v463, %v556
        %v558 = vrot.slane %v557, 2
        %v559 = vadd.f32 %v557, %v558
        %v560 = vrot.slane %v559, 1
        %v561 = vadd.f32 %v559, %v560
        %v562 = vrcp.pop 8.0
        %v563 = vmul.f32 %v471, %v562
        %v564 = vmul.f32 %v477, %v562
        %v565 = vmul.f32 %v483, %v562
        %v566 = vmul.f32 %v489, %v562
        %v567 = vmul.f32 %v495, %v562
        %v568 = vmul.f32 %v501, %v562
        %v569 = vmul.f32 %v507, %v562
        %v570 = vmul.f32 %v513, %v562
        %v571 = vmul.f32 %v519, %v562
        %v572 = vmul.f32 %v525, %v562
        %v573 = vmul.f32 %v531, %v562
        %v574 = vmul.f32 %v537, %v562
        %v575 = vmul.f32 %v543, %v562
        %v576 = vmul.f32 %v549, %v562
        %v577 = vmul.f32 %v555, %v562
        %v578 = vmul.f32 %v561, %v562
        %v579 = vmul.f32 %v388, %v388
        %v580 = vmul.f32 %v393, %v393
        %v581 = vmul.f32 %v398, %v398
        %v582 = vmul.f32 %v403, %v403
        %v583 = vmul.f32 %v408, %v408
        %v584 = vmul.f32 %v413, %v413
        %v585 = vmul.f32 %v418, %v418
        %v586 = vmul.f32 %v423, %v423
        %v587 = vmul.f32 %v428, %v428
        %v588 = vmul.f32 %v433, %v433
        %v589 = vmul.f32 %v438, %v438
        %v590 = vmul.f32 %v443, %v443
        %v591 = vmul.f32 %v448, %v448
        %v592 = vmul.f32 %v453, %v453
        %v593 = vmul.f32 %v458, %v458
        %v594 = vmul.f32 %v463, %v463
        %v595 = vrot.slane %v579, 4
        %v596 = vadd.f32 %v579, %v595
        %v597 = vrot.slane %v596, 2
        %v598 = vadd.f32 %v596, %v597
        %v599 = vrot.slane %v598, 1
        %v600 = vadd.f32 %v598, %v599
        %v601 = vrot.slane %v580, 4
        %v602 = vadd.f32 %v580, %v601
        %v603 = vrot.slane %v602, 2
        %v604 = vadd.f32 %v602, %v603
        %v605 = vrot.slane %v604, 1
        %v606 = vadd.f32 %v604, %v605
        %v607 = vrot.slane %v581, 4
        %v608 = vadd.f32 %v581, %v607
        %v609 = vrot.slane %v608, 2
        %v610 = vadd.f32 %v608, %v609
        %v611 = vrot.slane %v610, 1
        %v612 = vadd.f32 %v610, %v611
        %v613 = vrot.slane %v582, 4
        %v614 = vadd.f32 %v582, %v613
        %v615 = vrot.slane %v614, 2
        %v616 = vadd.f32 %v614, %v615
        %v617 = vrot.slane %v616, 1
        %v618 = vadd.f32 %v616, %v617
        %v619 = vrot.slane %v583, 4
        %v620 = vadd.f32 %v583, %v619
        %v621 = vrot.slane %v620, 2
        %v622 = vadd.f32 %v620, %v621
        %v623 = vrot.slane %v622, 1
        %v624 = vadd.f32 %v622, %v623
        %v625 = vrot.slane %v584, 4
        %v626 = vadd.f32 %v584, %v625
        %v627 = vrot.slane %v626, 2
        %v628 = vadd.f32 %v626, %v627
        %v629 = vrot.slane %v628, 1
        %v630 = vadd.f32 %v628, %v629
        %v631 = vrot.slane %v585, 4
        %v632 = vadd.f32 %v585, %v631
        %v633 = vrot.slane %v632, 2
        %v634 = vadd.f32 %v632, %v633
        %v635 = vrot.slane %v634, 1
        %v636 = vadd.f32 %v634, %v635
        %v637 = vrot.slane %v586, 4
        %v638 = vadd.f32 %v586, %v637
        %v639 = vrot.slane %v638, 2
        %v640 = vadd.f32 %v638, %v639
        %v641 = vrot.slane %v640, 1
        %v642 = vadd.f32 %v640, %v641
        %v643 = vrot.slane %v587, 4
        %v644 = vadd.f32 %v587, %v643
        %v645 = vrot.slane %v644, 2
        %v646 = vadd.f32 %v644, %v645
        %v647 = vrot.slane %v646, 1
        %v648 = vadd.f32 %v646, %v647
        %v649 = vrot.slane %v588, 4
        %v650 = vadd.f32 %v588, %v649
        %v651 = vrot.slane %v650, 2
        %v652 = vadd.f32 %v650, %v651
        %v653 = vrot.slane %v652, 1
        %v654 = vadd.f32 %v652, %v653
        %v655 = vrot.slane %v589, 4
        %v656 = vadd.f32 %v589, %v655
        %v657 = vrot.slane %v656, 2
        %v658 = vadd.f32 %v656, %v657
        %v659 = vrot.slane %v658, 1
        %v660 = vadd.f32 %v658, %v659
        %v661 = vrot.slane %v590, 4
        %v662 = vadd.f32 %v590, %v661
        %v663 = vrot.slane %v662, 2
        %v664 = vadd.f32 %v662, %v663
        %v665 = vrot.slane %v664, 1
        %v666 = vadd.f32 %v664, %v665
        %v667 = vrot.slane %v591, 4
        %v668 = vadd.f32 %v591, %v667
        %v669 = vrot.slane %v668, 2
        %v670 = vadd.f32 %v668, %v669
        %v671 = vrot.slane %v670, 1
        %v672 = vadd.f32 %v670, %v671
        %v673 = vrot.slane %v592, 4
        %v674 = vadd.f32 %v592, %v673
        %v675 = vrot.slane %v674, 2
        %v676 = vadd.f32 %v674, %v675
        %v677 = vrot.slane %v676, 1
        %v678 = vadd.f32 %v676, %v677
        %v679 = vrot.slane %v593, 4
        %v680 = vadd.f32 %v593, %v679
        %v681 = vrot.slane %v680, 2
        %v682 = vadd.f32 %v680, %v681
        %v683 = vrot.slane %v682, 1
        %v684 = vadd.f32 %v682, %v683
        %v685 = vrot.slane %v594, 4
        %v686 = vadd.f32 %v594, %v685
        %v687 = vrot.slane %v686, 2
        %v688 = vadd.f32 %v686, %v687
        %v689 = vrot.slane %v688, 1
        %v690 = vadd.f32 %v688, %v689
        %v691 = vmul.f32 %v600, %v562
        %v692 = vmul.f32 %v606, %v562
        %v693 = vmul.f32 %v612, %v562
        %v694 = vmul.f32 %v618, %v562
        %v695 = vmul.f32 %v624, %v562
        %v696 = vmul.f32 %v630, %v562
        %v697 = vmul.f32 %v636, %v562
        %v698 = vmul.f32 %v642, %v562
        %v699 = vmul.f32 %v648, %v562
        %v700 = vmul.f32 %v654, %v562
        %v701 = vmul.f32 %v660, %v562
        %v702 = vmul.f32 %v666, %v562
        %v703 = vmul.f32 %v672, %v562
        %v704 = vmul.f32 %v678, %v562
        %v705 = vmul.f32 %v684, %v562
        %v706 = vmul.f32 %v690, %v562
        %v707 = vmul.f32 %v563, %v563
        %v708 = vmul.f32 %v564, %v564
        %v709 = vmul.f32 %v565, %v565
        %v710 = vmul.f32 %v566, %v566
        %v711 = vmul.f32 %v567, %v567
        %v712 = vmul.f32 %v568, %v568
        %v713 = vmul.f32 %v569, %v569
        %v714 = vmul.f32 %v570, %v570
        %v715 = vmul.f32 %v571, %v571
        %v716 = vmul.f32 %v572, %v572
        %v717 = vmul.f32 %v573, %v573
        %v718 = vmul.f32 %v574, %v574
        %v719 = vmul.f32 %v575, %v575
        %v720 = vmul.f32 %v576, %v576
        %v721 = vmul.f32 %v577, %v577
        %v722 = vmul.f32 %v578, %v578
        %v723 = vsub.f32 %v691, %v707
        %v724 = vsub.f32 %v692, %v708
        %v725 = vsub.f32 %v693, %v709
        %v726 = vsub.f32 %v694, %v710
        %v727 = vsub.f32 %v695, %v711
        %v728 = vsub.f32 %v696, %v712
        %v729 = vsub.f32 %v697, %v713
        %v730 = vsub.f32 %v698, %v714
        %v731 = vsub.f32 %v699, %v715
        %v732 = vsub.f32 %v700, %v716
        %v733 = vsub.f32 %v701, %v717
        %v734 = vsub.f32 %v702, %v718
        %v735 = vsub.f32 %v703, %v719
        %v736 = vsub.f32 %v704, %v720
        %v737 = vsub.f32 %v705, %v721
        %v738 = vsub.f32 %v706, %v722
        %v739 = vmax.f32 %v723, 0.0
        %v740 = vmax.f32 %v724, 0.0
        %v741 = vmax.f32 %v725, 0.0
        %v742 = vmax.f32 %v726, 0.0
        %v743 = vmax.f32 %v727, 0.0
        %v744 = vmax.f32 %v728, 0.0
        %v745 = vmax.f32 %v729, 0.0
        %v746 = vmax.f32 %v730, 0.0
        %v747 = vmax.f32 %v731, 0.0
        %v748 = vmax.f32 %v732, 0.0
        %v749 = vmax.f32 %v733, 0.0
        %v750 = vmax.f32 %v734, 0.0
        %v751 = vmax.f32 %v735, 0.0
        %v752 = vmax.f32 %v736, 0.0
        %v753 = vmax.f32 %v737, 0.0
        %v754 = vmax.f32 %v738, 0.0
        %v755 = vsub.f32 %v388, %v563
        %v756 = vsub.f32 %v393, %v564
        %v757 = vsub.f32 %v398, %v565
        %v758 = vsub.f32 %v403, %v566
        %v759 = vsub.f32 %v408, %v567
        %v760 = vsub.f32 %v413, %v568
        %v761 = vsub.f32 %v418, %v569
        %v762 = vsub.f32 %v423, %v570
        %v763 = vsub.f32 %v428, %v571
        %v764 = vsub.f32 %v433, %v572
        %v765 = vsub.f32 %v438, %v573
        %v766 = vsub.f32 %v443, %v574
        %v767 = vsub.f32 %v448, %v575
        %v768 = vsub.f32 %v453, %v576
        %v769 = vsub.f32 %v458, %v577
        %v770 = vsub.f32 %v463, %v578
        %v771 = vadd.f32 %v739, 1e-05
        %v772 = vadd.f32 %v740, 1e-05
        %v773 = vadd.f32 %v741, 1e-05
        %v774 = vadd.f32 %v742, 1e-05
        %v775 = vadd.f32 %v743, 1e-05
        %v776 = vadd.f32 %v744, 1e-05
        %v777 = vadd.f32 %v745, 1e-05
        %v778 = vadd.f32 %v746, 1e-05
        %v779 = vadd.f32 %v747, 1e-05
        %v780 = vadd.f32 %v748, 1e-05
        %v781 = vadd.f32 %v749, 1e-05
        %v782 = vadd.f32 %v750, 1e-05
        %v783 = vadd.f32 %v751, 1e-05
        %v784 = vadd.f32 %v752, 1e-05
        %v785 = vadd.f32 %v753, 1e-05
        %v786 = vadd.f32 %v754, 1e-05
        %v787 = vrsqrt.pop %v771
        %v788 = vrsqrt.pop %v772
        %v789 = vrsqrt.pop %v773
        %v790 = vrsqrt.pop %v774
        %v791 = vrsqrt.pop %v775
        %v792 = vrsqrt.pop %v776
        %v793 = vrsqrt.pop %v777
        %v794 = vrsqrt.pop %v778
        %v795 = vrsqrt.pop %v779
        %v796 = vrsqrt.pop %v780
        %v797 = vrsqrt.pop %v781
        %v798 = vrsqrt.pop %v782
        %v799 = vrsqrt.pop %v783
        %v800 = vrsqrt.pop %v784
        %v801 = vrsqrt.pop %v785
        %v802 = vrsqrt.pop %v786
        %v803 = vmul.f32 %v755, %v787
        %v804 = vmul.f32 %v756, %v788
        %v805 = vmul.f32 %v757, %v789
        %v806 = vmul.f32 %v758, %v790
        %v807 = vmul.f32 %v759, %v791
        %v808 = vmul.f32 %v760, %v792
        %v809 = vmul.f32 %v761, %v793
        %v810 = vmul.f32 %v762, %v794
        %v811 = vmul.f32 %v763, %v795
        %v812 = vmul.f32 %v764, %v796
        %v813 = vmul.f32 %v765, %v797
        %v814 = vmul.f32 %v766, %v798
        %v815 = vmul.f32 %v767, %v799
        %v816 = vmul.f32 %v768, %v800
        %v817 = vmul.f32 %v769, %v801
        %v818 = vmul.f32 %v770, %v802
        %v819 = vld [vmem:[#allocation7] sm:$0xff]
        %v820 = vld [vmem:[#allocation7 + $0x8] sm:$0xff]
        %v821 = vld [vmem:[#allocation7 + $0x10] sm:$0xff]
        %v822 = vld [vmem:[#allocation7 + $0x18] sm:$0xff]
        %v823 = vld [vmem:[#allocation7 + $0x20] sm:$0xff]
        %v824 = vld [vmem:[#allocation7 + $0x28] sm:$0xff]
        %v825 = vld [vmem:[#allocation7 + $0x30] sm:$0xff]
        %v826 = vld [vmem:[#allocation7 + $0x38] sm:$0xff]
        %v827 = vld [vmem:[#allocation7 + $0x40] sm:$0xff]
        %v828 = vld [vmem:[#allocation7 + $0x48] sm:$0xff]
        %v829 = vld [vmem:[#allocation7 + $0x50] sm:$0xff]
        %v830 = vld [vmem:[#allocation7 + $0x58] sm:$0xff]
        %v831 = vld [vmem:[#allocation7 + $0x60] sm:$0xff]
        %v832 = vld [vmem:[#allocation7 + $0x68] sm:$0xff]
        %v833 = vld [vmem:[#allocation7 + $0x70] sm:$0xff]
        %v834 = vld [vmem:[#allocation7 + $0x78] sm:$0xff]
        %v835 = vld [vmem:[#allocation7 + $0x80] sm:$0xff]
        %v836 = vld [vmem:[#allocation7 + $0x88] sm:$0xff]
        %v837 = vld [vmem:[#allocation7 + $0x90] sm:$0xff]
        %v838 = vld [vmem:[#allocation7 + $0x98] sm:$0xff]
        %v839 = vld [vmem:[#allocation7 + $0xa0] sm:$0xff]
        %v840 = vld [vmem:[#allocation7 + $0xa8] sm:$0xff]
        %v841 = vld [vmem:[#allocation7 + $0xb0] sm:$0xff]
        %v842 = vld [vmem:[#allocation7 + $0xb8] sm:$0xff]
        %v843 = vld [vmem:[#allocation7 + $0xc0] sm:$0xff]
        %v844 = vld [vmem:[#allocation7 + $0xc8] sm:$0xff]
        %v845 = vld [vmem:[#allocation7 + $0xd0] sm:$0xff]
        %v846 = vld [vmem:[#allocation7 + $0xd8] sm:$0xff]
        %v847 = vld [vmem:[#allocation7 + $0xe0] sm:$0xff]
        %v848 = vld [vmem:[#allocation7 + $0xe8] sm:$0xff]
        %v849 = vld [vmem:[#allocation7 + $0xf0] sm:$0xff]
        %v850 = vld [vmem:[#allocation7 + $0xf8] sm:$0xff]
        %851 = vmatprep.subr.mxu0 %v850
        %852 = vmatpush1.msra.mxu0 %v849
        %853 = vmatprep.subr.mxu0 %v848
        %854 = vmatpush1.msra.mxu0 %v847
        %855 = vmatprep.subr.mxu0 %v846
        %856 = vmatpush1.msra.mxu0 %v845
        %857 = vmatprep.subr.mxu0 %v844
        %858 = vmatpush1.msra.mxu0 %v843
        %859 = vmatprep.subr.mxu0 %v842
        %860 = vmatpush1.msra.mxu0 %v841
        %861 = vmatprep.subr.mxu0 %v840
        %862 = vmatpush1.msra.mxu0 %v839
        %863 = vmatprep.subr.mxu0 %v838
        %864 = vmatpush1.msra.mxu0 %v837
        %865 = vmatprep.subr.mxu0 %v836
        %866 = vmatpush1.msra.mxu0 %v835
        %867 = vmatprep.subr.mxu0 %v834
        %868 = vmatpush1.msra.mxu0 %v833
        %869 = vmatprep.subr.mxu0 %v832
        %870 = vmatpush1.msra.mxu0 %v831
        %871 = vmatprep.subr.mxu0 %v830
        %872 = vmatpush1.msra.mxu0 %v829
        %873 = vmatprep.subr.mxu0 %v828
        %874 = vmatpush1.msra.mxu0 %v827
        %875 = vmatprep.subr.mxu0 %v826
        %876 = vmatpush1.msra.mxu0 %v825
        %877 = vmatprep.subr.mxu0 %v824
        %878 = vmatpush1.msra.mxu0 %v823
        %879 = vmatprep.subr.mxu0 %v822
        %880 = vmatpush1.msra.mxu0 %v821
        %881 = vmatprep.subr.mxu0 %v820
        %882 = vmatpush1.msra.mxu0 %v819
        %883 = vmatprep.subr.mxu0 0.0
        %884 = vmatpush2.msra.mxu0 0.0
        %885 = vmatprep.subr.mxu0 0.0
        %886 = vmatpush2.msra.mxu0 0.0
        %887 = vmatprep.subr.mxu0 0.0
        %888 = vmatpush2.msra.mxu0 0.0
        %889 = vmatprep.subr.mxu0 0.0
        %890 = vmatpush2.msra.mxu0 0.0
        %891 = vmatprep.subr.mxu0 0.0
        %892 = vmatpush2.msra.mxu0 0.0
        %893 = vmatprep.subr.mxu0 0.0
        %894 = vmatpush2.msra.mxu0 0.0
        %895 = vmatprep.subr.mxu0 0.0
        %896 = vmatpush2.msra.mxu0 0.0
        %897 = vmatprep.subr.mxu0 0.0
        %898 = vmatpush2.msra.mxu0 0.0
        %899 = vmatprep.subr.mxu0 0.0
        %900 = vmatpush2.msra.mxu0 0.0
        %901 = vmatprep.subr.mxu0 0.0
        %902 = vmatpush2.msra.mxu0 0.0
        %903 = vmatprep.subr.mxu0 0.0
        %904 = vmatpush2.msra.mxu0 0.0
        %905 = vmatprep.subr.mxu0 0.0
        %906 = vmatpush2.msra.mxu0 0.0
        %907 = vmatprep.subr.mxu0 0.0
        %908 = vmatpush2.msra.mxu0 0.0
        %909 = vmatprep.subr.mxu0 0.0
        %910 = vmatpush2.msra.mxu0 0.0
        %911 = vmatprep.subr.mxu0 0.0
        %912 = vmatpush2.msra.mxu0 0.0
        %913 = vmatprep.subr.mxu0 0.0
        %914 = vmatpush2.msra.mxu0 0.0
        %915 = vmatprep.mubr.f32.mxu0 0.0
        %916 = vmatmul.mubr.f32.gmra.mxu0 %v803
        %v917 = vpop.f32.mrf.mxu0
        %v918 = vadd.f32 0.0, %v917
        %v919 = vpop.f32.mrf.mxu0
        %v920 = vadd.f32 0.0, %v919
        %921 = vmatprep.mubr.f32.mxu0 0.0
        %922 = vmatmul.mubr.f32.gmra.mxu0 %v804
        %v923 = vpop.f32.mrf.mxu0
        %v924 = vadd.f32 0.0, %v923
        %v925 = vpop.f32.mrf.mxu0
        %v926 = vadd.f32 0.0, %v925
        %927 = vmatprep.mubr.f32.mxu0 0.0
        %928 = vmatmul.mubr.f32.gmra.mxu0 %v805
        %v929 = vpop.f32.mrf.mxu0
        %v930 = vadd.f32 0.0, %v929
        %v931 = vpop.f32.mrf.mxu0
        %v932 = vadd.f32 0.0, %v931
        %933 = vmatprep.mubr.f32.mxu0 0.0
        %934 = vmatmul.mubr.f32.gmra.mxu0 %v806
        %v935 = vpop.f32.mrf.mxu0
        %v936 = vadd.f32 0.0, %v935
        %v937 = vpop.f32.mrf.mxu0
        %v938 = vadd.f32 0.0, %v937
        %939 = vmatprep.mubr.f32.mxu0 0.0
        %940 = vmatmul.mubr.f32.gmra.mxu0 %v807
        %v941 = vpop.f32.mrf.mxu0
        %v942 = vadd.f32 0.0, %v941
        %v943 = vpop.f32.mrf.mxu0
        %v944 = vadd.f32 0.0, %v943
        %945 = vmatprep.mubr.f32.mxu0 0.0
        %946 = vmatmul.mubr.f32.gmra.mxu0 %v808
        %v947 = vpop.f32.mrf.mxu0
        %v948 = vadd.f32 0.0, %v947
        %v949 = vpop.f32.mrf.mxu0
        %v950 = vadd.f32 0.0, %v949
        %951 = vmatprep.mubr.f32.mxu0 0.0
        %952 = vmatmul.mubr.f32.gmra.mxu0 %v809
        %v953 = vpop.f32.mrf.mxu0
        %v954 = vadd.f32 0.0, %v953
        %v955 = vpop.f32.mrf.mxu0
        %v956 = vadd.f32 0.0, %v955
        %957 = vmatprep.mubr.f32.mxu0 0.0
        %958 = vmatmul.mubr.f32.gmra.mxu0 %v810
        %v959 = vpop.f32.mrf.mxu0
        %v960 = vadd.f32 0.0, %v959
        %v961 = vpop.f32.mrf.mxu0
        %v962 = vadd.f32 0.0, %v961
        %963 = vmatprep.mubr.f32.mxu0 0.0
        %964 = vmatmul.mubr.f32.gmra.mxu0 %v811
        %v965 = vpop.f32.mrf.mxu0
        %v966 = vadd.f32 0.0, %v965
        %v967 = vpop.f32.mrf.mxu0
        %v968 = vadd.f32 0.0, %v967
        %969 = vmatprep.mubr.f32.mxu0 0.0
        %970 = vmatmul.mubr.f32.gmra.mxu0 %v812
        %v971 = vpop.f32.mrf.mxu0
        %v972 = vadd.f32 0.0, %v971
        %v973 = vpop.f32.mrf.mxu0
        %v974 = vadd.f32 0.0, %v973
        %975 = vmatprep.mubr.f32.mxu0 0.0
        %976 = vmatmul.mubr.f32.gmra.mxu0 %v813
        %v977 = vpop.f32.mrf.mxu0
        %v978 = vadd.f32 0.0, %v977
        %v979 = vpop.f32.mrf.mxu0
        %v980 = vadd.f32 0.0, %v979
        %981 = vmatprep.mubr.f32.mxu0 0.0
        %982 = vmatmul.mubr.f32.gmra.mxu0 %v814
        %v983 = vpop.f32.mrf.mxu0
        %v984 = vadd.f32 0.0, %v983
        %v985 = vpop.f32.mrf.mxu0
        %v986 = vadd.f32 0.0, %v985
        %987 = vmatprep.mubr.f32.mxu0 0.0
        %988 = vmatmul.mubr.f32.gmra.mxu0 %v815
        %v989 = vpop.f32.mrf.mxu0
        %v990 = vadd.f32 0.0, %v989
        %v991 = vpop.f32.mrf.mxu0
        %v992 = vadd.f32 0.0, %v991
        %993 = vmatprep.mubr.f32.mxu0 0.0
        %994 = vmatmul.mubr.f32.gmra.mxu0 %v816
        %v995 = vpop.f32.mrf.mxu0
        %v996 = vadd.f32 0.0, %v995
        %v997 = vpop.f32.mrf.mxu0
        %v998 = vadd.f32 0.0, %v997
        %999 = vmatprep.mubr.f32.mxu0 0.0
        %1000 = vmatmul.mubr.f32.gmra.mxu0 %v817
        %v1001 = vpop.f32.mrf.mxu0
        %v1002 = vadd.f32 0.0, %v1001
        %v1003 = vpop.f32.mrf.mxu0
        %v1004 = vadd.f32 0.0, %v1003
        %1005 = vmatprep.mubr.f32.mxu0 0.0
        %1006 = vmatmul.mubr.f32.gmra.mxu0 %v818
        %v1007 = vpop.f32.mrf.mxu0
        %v1008 = vadd.f32 0.0, %v1007
        %v1009 = vpop.f32.mrf.mxu0
        %v1010 = vadd.f32 0.0, %v1009
        %1011 = vdwg.mxu0
        %v1012 = vrot.slane %v918, 4
        %v1013 = vadd.f32 %v918, %v1012
        %v1014 = vrot.slane %v1013, 2
        %v1015 = vadd.f32 %v1013, %v1014
        %v1016 = vrot.slane %v1015, 1
        %v1017 = vadd.f32 %v1015, %v1016
        %v1018 = vrot.slane %v920, 4
        %v1019 = vadd.f32 %v920, %v1018
        %v1020 = vrot.slane %v1019, 2
        %v1021 = vadd.f32 %v1019, %v1020
        %v1022 = vrot.slane %v1021, 1
        %v1023 = vadd.f32 %v1021, %v1022
        %v1024 = vrot.slane %v924, 4
        %v1025 = vadd.f32 %v924, %v1024
        %v1026 = vrot.slane %v1025, 2
        %v1027 = vadd.f32 %v1025, %v1026
        %v1028 = vrot.slane %v1027, 1
        %v1029 = vadd.f32 %v1027, %v1028
        %v1030 = vrot.slane %v926, 4
        %v1031 = vadd.f32 %v926, %v1030
        %v1032 = vrot.slane %v1031, 2
        %v1033 = vadd.f32 %v1031, %v1032
        %v1034 = vrot.slane %v1033, 1
        %v1035 = vadd.f32 %v1033, %v1034
        %v1036 = vrot.slane %v930, 4
        %v1037 = vadd.f32 %v930, %v1036
        %v1038 = vrot.slane %v1037, 2
        %v1039 = vadd.f32 %v1037, %v1038
        %v1040 = vrot.slane %v1039, 1
        %v1041 = vadd.f32 %v1039, %v1040
        %v1042 = vrot.slane %v932, 4
        %v1043 = vadd.f32 %v932, %v1042
        %v1044 = vrot.slane %v1043, 2
        %v1045 = vadd.f32 %v1043, %v1044
        %v1046 = vrot.slane %v1045, 1
        %v1047 = vadd.f32 %v1045, %v1046
        %v1048 = vrot.slane %v936, 4
        %v1049 = vadd.f32 %v936, %v1048
        %v1050 = vrot.slane %v1049, 2
        %v1051 = vadd.f32 %v1049, %v1050
        %v1052 = vrot.slane %v1051, 1
        %v1053 = vadd.f32 %v1051, %v1052
        %v1054 = vrot.slane %v938, 4
        %v1055 = vadd.f32 %v938, %v1054
        %v1056 = vrot.slane %v1055, 2
        %v1057 = vadd.f32 %v1055, %v1056
        %v1058 = vrot.slane %v1057, 1
        %v1059 = vadd.f32 %v1057, %v1058
        %v1060 = vrot.slane %v942, 4
        %v1061 = vadd.f32 %v942, %v1060
        %v1062 = vrot.slane %v1061, 2
        %v1063 = vadd.f32 %v1061, %v1062
        %v1064 = vrot.slane %v1063, 1
        %v1065 = vadd.f32 %v1063, %v1064
        %v1066 = vrot.slane %v944, 4
        %v1067 = vadd.f32 %v944, %v1066
        %v1068 = vrot.slane %v1067, 2
        %v1069 = vadd.f32 %v1067, %v1068
        %v1070 = vrot.slane %v1069, 1
        %v1071 = vadd.f32 %v1069, %v1070
        %v1072 = vrot.slane %v948, 4
        %v1073 = vadd.f32 %v948, %v1072
        %v1074 = vrot.slane %v1073, 2
        %v1075 = vadd.f32 %v1073, %v1074
        %v1076 = vrot.slane %v1075, 1
        %v1077 = vadd.f32 %v1075, %v1076
        %v1078 = vrot.slane %v950, 4
        %v1079 = vadd.f32 %v950, %v1078
        %v1080 = vrot.slane %v1079, 2
        %v1081 = vadd.f32 %v1079, %v1080
        %v1082 = vrot.slane %v1081, 1
        %v1083 = vadd.f32 %v1081, %v1082
        %v1084 = vrot.slane %v954, 4
        %v1085 = vadd.f32 %v954, %v1084
        %v1086 = vrot.slane %v1085, 2
        %v1087 = vadd.f32 %v1085, %v1086
        %v1088 = vrot.slane %v1087, 1
        %v1089 = vadd.f32 %v1087, %v1088
        %v1090 = vrot.slane %v956, 4
        %v1091 = vadd.f32 %v956, %v1090
        %v1092 = vrot.slane %v1091, 2
        %v1093 = vadd.f32 %v1091, %v1092
        %v1094 = vrot.slane %v1093, 1
        %v1095 = vadd.f32 %v1093, %v1094
        %v1096 = vrot.slane %v960, 4
        %v1097 = vadd.f32 %v960, %v1096
        %v1098 = vrot.slane %v1097, 2
        %v1099 = vadd.f32 %v1097, %v1098
        %v1100 = vrot.slane %v1099, 1
        %v1101 = vadd.f32 %v1099, %v1100
        %v1102 = vrot.slane %v962, 4
        %v1103 = vadd.f32 %v962, %v1102
        %v1104 = vrot.slane %v1103, 2
        %v1105 = vadd.f32 %v1103, %v1104
        %v1106 = vrot.slane %v1105, 1
        %v1107 = vadd.f32 %v1105, %v1106
        %v1108 = vrot.slane %v966, 4
        %v1109 = vadd.f32 %v966, %v1108
        %v1110 = vrot.slane %v1109, 2
        %v1111 = vadd.f32 %v1109, %v1110
        %v1112 = vrot.slane %v1111, 1
        %v1113 = vadd.f32 %v1111, %v1112
        %v1114 = vrot.slane %v968, 4
        %v1115 = vadd.f32 %v968, %v1114
        %v1116 = vrot.slane %v1115, 2
        %v1117 = vadd.f32 %v1115, %v1116
        %v1118 = vrot.slane %v1117, 1
        %v1119 = vadd.f32 %v1117, %v1118
        %v1120 = vrot.slane %v972, 4
        %v1121 = vadd.f32 %v972, %v1120
        %v1122 = vrot.slane %v1121, 2
        %v1123 = vadd.f32 %v1121, %v1122
        %v1124 = vrot.slane %v1123, 1
        %v1125 = vadd.f32 %v1123, %v1124
        %v1126 = vrot.slane %v974, 4
        %v1127 = vadd.f32 %v974, %v1126
        %v1128 = vrot.slane %v1127, 2
        %v1129 = vadd.f32 %v1127, %v1128
        %v1130 = vrot.slane %v1129, 1
        %v1131 = vadd.f32 %v1129, %v1130
        %v1132 = vrot.slane %v978, 4
        %v1133 = vadd.f32 %v978, %v1132
        %v1134 = vrot.slane %v1133, 2
        %v1135 = vadd.f32 %v1133, %v1134
        %v1136 = vrot.slane %v1135, 1
        %v1137 = vadd.f32 %v1135, %v1136
        %v1138 = vrot.slane %v980, 4
        %v1139 = vadd.f32 %v980, %v1138
        %v1140 = vrot.slane %v1139, 2
        %v1141 = vadd.f32 %v1139, %v1140
        %v1142 = vrot.slane %v1141, 1
        %v1143 = vadd.f32 %v1141, %v1142
        %v1144 = vrot.slane %v984, 4
        %v1145 = vadd.f32 %v984, %v1144
        %v1146 = vrot.slane %v1145, 2
        %v1147 = vadd.f32 %v1145, %v1146
        %v1148 = vrot.slane %v1147, 1
        %v1149 = vadd.f32 %v1147, %v1148
        %v1150 = vrot.slane %v986, 4
        %v1151 = vadd.f32 %v986, %v1150
        %v1152 = vrot.slane %v1151, 2
        %v1153 = vadd.f32 %v1151, %v1152
        %v1154 = vrot.slane %v1153, 1
        %v1155 = vadd.f32 %v1153, %v1154
        %v1156 = vrot.slane %v990, 4
        %v1157 = vadd.f32 %v990, %v1156
        %v1158 = vrot.slane %v1157, 2
        %v1159 = vadd.f32 %v1157, %v1158
        %v1160 = vrot.slane %v1159, 1
        %v1161 = vadd.f32 %v1159, %v1160
        %v1162 = vrot.slane %v992, 4
        %v1163 = vadd.f32 %v992, %v1162
        %v1164 = vrot.slane %v1163, 2
        %v1165 = vadd.f32 %v1163, %v1164
        %v1166 = vrot.slane %v1165, 1
        %v1167 = vadd.f32 %v1165, %v1166
        %v1168 = vrot.slane %v996, 4
        %v1169 = vadd.f32 %v996, %v1168
        %v1170 = vrot.slane %v1169, 2
        %v1171 = vadd.f32 %v1169, %v1170
        %v1172 = vrot.slane %v1171, 1
        %v1173 = vadd.f32 %v1171, %v1172
        %v1174 = vrot.slane %v998, 4
        %v1175 = vadd.f32 %v998, %v1174
        %v1176 = vrot.slane %v1175, 2
        %v1177 = vadd.f32 %v1175, %v1176
        %v1178 = vrot.slane %v1177, 1
        %v1179 = vadd.f32 %v1177, %v1178
        %v1180 = vrot.slane %v1002, 4
        %v1181 = vadd.f32 %v1002, %v1180
        %v1182 = vrot.slane %v1181, 2
        %v1183 = vadd.f32 %v1181, %v1182
        %v1184 = vrot.slane %v1183, 1
        %v1185 = vadd.f32 %v1183, %v1184
        %v1186 = vrot.slane %v1004, 4
        %v1187 = vadd.f32 %v1004, %v1186
        %v1188 = vrot.slane %v1187, 2
        %v1189 = vadd.f32 %v1187, %v1188
        %v1190 = vrot.slane %v1189, 1
        %v1191 = vadd.f32 %v1189, %v1190
        %v1192 = vrot.slane %v1008, 4
        %v1193 = vadd.f32 %v1008, %v1192
        %v1194 = vrot.slane %v1193, 2
        %v1195 = vadd.f32 %v1193, %v1194
        %v1196 = vrot.slane %v1195, 1
        %v1197 = vadd.f32 %v1195, %v1196
        %v1198 = vrot.slane %v1010, 4
        %v1199 = vadd.f32 %v1010, %v1198
        %v1200 = vrot.slane %v1199, 2
        %v1201 = vadd.f32 %v1199, %v1200
        %v1202 = vrot.slane %v1201, 1
        %v1203 = vadd.f32 %v1201, %v1202
        %v1204 = vmul.f32 %v1017, %v562
        %v1205 = vmul.f32 %v1023, %v562
        %v1206 = vmul.f32 %v1029, %v562
        %v1207 = vmul.f32 %v1035, %v562
        %v1208 = vmul.f32 %v1041, %v562
        %v1209 = vmul.f32 %v1047, %v562
        %v1210 = vmul.f32 %v1053, %v562
        %v1211 = vmul.f32 %v1059, %v562
        %v1212 = vmul.f32 %v1065, %v562
        %v1213 = vmul.f32 %v1071, %v562
        %v1214 = vmul.f32 %v1077, %v562
        %v1215 = vmul.f32 %v1083, %v562
        %v1216 = vmul.f32 %v1089, %v562
        %v1217 = vmul.f32 %v1095, %v562
        %v1218 = vmul.f32 %v1101, %v562
        %v1219 = vmul.f32 %v1107, %v562
        %v1220 = vmul.f32 %v1113, %v562
        %v1221 = vmul.f32 %v1119, %v562
        %v1222 = vmul.f32 %v1125, %v562
        %v1223 = vmul.f32 %v1131, %v562
        %v1224 = vmul.f32 %v1137, %v562
        %v1225 = vmul.f32 %v1143, %v562
        %v1226 = vmul.f32 %v1149, %v562
        %v1227 = vmul.f32 %v1155, %v562
        %v1228 = vmul.f32 %v1161, %v562
        %v1229 = vmul.f32 %v1167, %v562
        %v1230 = vmul.f32 %v1173, %v562
        %v1231 = vmul.f32 %v1179, %v562
        %v1232 = vmul.f32 %v1185, %v562
        %v1233 = vmul.f32 %v1191, %v562
        %v1234 = vmul.f32 %v1197, %v562
        %v1235 = vmul.f32 %v1203, %v562
        %v1236 = vmul.f32 %v918, %v918
        %v1237 = vmul.f32 %v920, %v920
        %v1238 = vmul.f32 %v924, %v924
        %v1239 = vmul.f32 %v926, %v926
        %v1240 = vmul.f32 %v930, %v930
        %v1241 = vmul.f32 %v932, %v932
        %v1242 = vmul.f32 %v936, %v936
        %v1243 = vmul.f32 %v938, %v938
        %v1244 = vmul.f32 %v942, %v942
        %v1245 = vmul.f32 %v944, %v944
        %v1246 = vmul.f32 %v948, %v948
        %v1247 = vmul.f32 %v950, %v950
        %v1248 = vmul.f32 %v954, %v954
        %v1249 = vmul.f32 %v956, %v956
        %v1250 = vmul.f32 %v960, %v960
        %v1251 = vmul.f32 %v962, %v962
        %v1252 = vmul.f32 %v966, %v966
        %v1253 = vmul.f32 %v968, %v968
        %v1254 = vmul.f32 %v972, %v972
        %v1255 = vmul.f32 %v974, %v974
        %v1256 = vmul.f32 %v978, %v978
        %v1257 = vmul.f32 %v980, %v980
        %v1258 = vmul.f32 %v984, %v984
        %v1259 = vmul.f32 %v986, %v986
        %v1260 = vmul.f32 %v990, %v990
        %v1261 = vmul.f32 %v992, %v992
        %v1262 = vmul.f32 %v996, %v996
        %v1263 = vmul.f32 %v998, %v998
        %v1264 = vmul.f32 %v1002, %v1002
        %v1265 = vmul.f32 %v1004, %v1004
        %v1266 = vmul.f32 %v1008, %v1008
        %v1267 = vmul.f32 %v1010, %v1010
        %v1268 = vrot.slane %v1236, 4
        %v1269 = vadd.f32 %v1236, %v1268
        %v1270 = vrot.slane %v1269, 2
        %v1271 = vadd.f32 %v1269, %v1270
        %v1272 = vrot.slane %v1271, 1
        %v1273 = vadd.f32 %v1271, %v1272
        %v1274 = vrot.slane %v1237, 4
        %v1275 = vadd.f32 %v1237, %v1274
        %v1276 = vrot.slane %v1275, 2
        %v1277 = vadd.f32 %v1275, %v1276
        %v1278 = vrot.slane %v1277, 1
        %v1279 = vadd.f32 %v1277, %v1278
        %v1280 = vrot.slane %v1238, 4
        %v1281 = vadd.f32 %v1238, %v1280
        %v1282 = vrot.slane %v1281, 2
        %v1283 = vadd.f32 %v1281, %v1282
        %v1284 = vrot.slane %v1283, 1
        %v1285 = vadd.f32 %v1283, %v1284
        %v1286 = vrot.slane %v1239, 4
        %v1287 = vadd.f32 %v1239, %v1286
        %v1288 = vrot.slane %v1287, 2
        %v1289 = vadd.f32 %v1287, %v1288
        %v1290 = vrot.slane %v1289, 1
        %v1291 = vadd.f32 %v1289, %v1290
        %v1292 = vrot.slane %v1240, 4
        %v1293 = vadd.f32 %v1240, %v1292
        %v1294 = vrot.slane %v1293, 2
        %v1295 = vadd.f32 %v1293, %v1294
        %v1296 = vrot.slane %v1295, 1
        %v1297 = vadd.f32 %v1295, %v1296
        %v1298 = vrot.slane %v1241, 4
        %v1299 = vadd.f32 %v1241, %v1298
        %v1300 = vrot.slane %v1299, 2
        %v1301 = vadd.f32 %v1299, %v1300
        %v1302 = vrot.slane %v1301, 1
        %v1303 = vadd.f32 %v1301, %v1302
        %v1304 = vrot.slane %v1242, 4
        %v1305 = vadd.f32 %v1242, %v1304
        %v1306 = vrot.slane %v1305, 2
        %v1307 = vadd.f32 %v1305, %v1306
        %v1308 = vrot.slane %v1307, 1
        %v1309 = vadd.f32 %v1307, %v1308
        %v1310 = vrot.slane %v1243, 4
        %v1311 = vadd.f32 %v1243, %v1310
        %v1312 = vrot.slane %v1311, 2
        %v1313 = vadd.f32 %v1311, %v1312
        %v1314 = vrot.slane %v1313, 1
        %v1315 = vadd.f32 %v1313, %v1314
        %v1316 = vrot.slane %v1244, 4
        %v1317 = vadd.f32 %v1244, %v1316
        %v1318 = vrot.slane %v1317, 2
        %v1319 = vadd.f32 %v1317, %v1318
        %v1320 = vrot.slane %v1319, 1
        %v1321 = vadd.f32 %v1319, %v1320
        %v1322 = vrot.slane %v1245, 4
        %v1323 = vadd.f32 %v1245, %v1322
        %v1324 = vrot.slane %v1323, 2
        %v1325 = vadd.f32 %v1323, %v1324
        %v1326 = vrot.slane %v1325, 1
        %v1327 = vadd.f32 %v1325, %v1326
        %v1328 = vrot.slane %v1246, 4
        %v1329 = vadd.f32 %v1246, %v1328
        %v1330 = vrot.slane %v1329, 2
        %v1331 = vadd.f32 %v1329, %v1330
        %v1332 = vrot.slane %v1331, 1
        %v1333 = vadd.f32 %v1331, %v1332
        %v1334 = vrot.slane %v1247, 4
        %v1335 = vadd.f32 %v1247, %v1334
        %v1336 = vrot.slane %v1335, 2
        %v1337 = vadd.f32 %v1335, %v1336
        %v1338 = vrot.slane %v1337, 1
        %v1339 = vadd.f32 %v1337, %v1338
        %v1340 = vrot.slane %v1248, 4
        %v1341 = vadd.f32 %v1248, %v1340
        %v1342 = vrot.slane %v1341, 2
        %v1343 = vadd.f32 %v1341, %v1342
        %v1344 = vrot.slane %v1343, 1
        %v1345 = vadd.f32 %v1343, %v1344
        %v1346 = vrot.slane %v1249, 4
        %v1347 = vadd.f32 %v1249, %v1346
        %v1348 = vrot.slane %v1347, 2
        %v1349 = vadd.f32 %v1347, %v1348
        %v1350 = vrot.slane %v1349, 1
        %v1351 = vadd.f32 %v1349, %v1350
        %v1352 = vrot.slane %v1250, 4
        %v1353 = vadd.f32 %v1250, %v1352
        %v1354 = vrot.slane %v1353, 2
        %v1355 = vadd.f32 %v1353, %v1354
        %v1356 = vrot.slane %v1355, 1
        %v1357 = vadd.f32 %v1355, %v1356
        %v1358 = vrot.slane %v1251, 4
        %v1359 = vadd.f32 %v1251, %v1358
        %v1360 = vrot.slane %v1359, 2
        %v1361 = vadd.f32 %v1359, %v1360
        %v1362 = vrot.slane %v1361, 1
        %v1363 = vadd.f32 %v1361, %v1362
        %v1364 = vrot.slane %v1252, 4
        %v1365 = vadd.f32 %v1252, %v1364
        %v1366 = vrot.slane %v1365, 2
        %v1367 = vadd.f32 %v1365, %v1366
        %v1368 = vrot.slane %v1367, 1
        %v1369 = vadd.f32 %v1367, %v1368
        %v1370 = vrot.slane %v1253, 4
        %v1371 = vadd.f32 %v1253, %v1370
        %v1372 = vrot.slane %v1371, 2
        %v1373 = vadd.f32 %v1371, %v1372
        %v1374 = vrot.slane %v1373, 1
        %v1375 = vadd.f32 %v1373, %v1374
        %v1376 = vrot.slane %v1254, 4
        %v1377 = vadd.f32 %v1254, %v1376
        %v1378 = vrot.slane %v1377, 2
        %v1379 = vadd.f32 %v1377, %v1378
        %v1380 = vrot.slane %v1379, 1
        %v1381 = vadd.f32 %v1379, %v1380
        %v1382 = vrot.slane %v1255, 4
        %v1383 = vadd.f32 %v1255, %v1382
        %v1384 = vrot.slane %v1383, 2
        %v1385 = vadd.f32 %v1383, %v1384
        %v1386 = vrot.slane %v1385, 1
        %v1387 = vadd.f32 %v1385, %v1386
        %v1388 = vrot.slane %v1256, 4
        %v1389 = vadd.f32 %v1256, %v1388
        %v1390 = vrot.slane %v1389, 2
        %v1391 = vadd.f32 %v1389, %v1390
        %v1392 = vrot.slane %v1391, 1
        %v1393 = vadd.f32 %v1391, %v1392
        %v1394 = vrot.slane %v1257, 4
        %v1395 = vadd.f32 %v1257, %v1394
        %v1396 = vrot.slane %v1395, 2
        %v1397 = vadd.f32 %v1395, %v1396
        %v1398 = vrot.slane %v1397, 1
        %v1399 = vadd.f32 %v1397, %v1398
        %v1400 = vrot.slane %v1258, 4
        %v1401 = vadd.f32 %v1258, %v1400
        %v1402 = vrot.slane %v1401, 2
        %v1403 = vadd.f32 %v1401, %v1402
        %v1404 = vrot.slane %v1403, 1
        %v1405 = vadd.f32 %v1403, %v1404
        %v1406 = vrot.slane %v1259, 4
        %v1407 = vadd.f32 %v1259, %v1406
        %v1408 = vrot.slane %v1407, 2
        %v1409 = vadd.f32 %v1407, %v1408
        %v1410 = vrot.slane %v1409, 1
        %v1411 = vadd.f32 %v1409, %v1410
        %v1412 = vrot.slane %v1260, 4
        %v1413 = vadd.f32 %v1260, %v1412
        %v1414 = vrot.slane %v1413, 2
        %v1415 = vadd.f32 %v1413, %v1414
        %v1416 = vrot.slane %v1415, 1
        %v1417 = vadd.f32 %v1415, %v1416
        %v1418 = vrot.slane %v1261, 4
        %v1419 = vadd.f32 %v1261, %v1418
        %v1420 = vrot.slane %v1419, 2
        %v1421 = vadd.f32 %v1419, %v1420
        %v1422 = vrot.slane %v1421, 1
        %v1423 = vadd.f32 %v1421, %v1422
        %v1424 = vrot.slane %v1262, 4
        %v1425 = vadd.f32 %v1262, %v1424
        %v1426 = vrot.slane %v1425, 2
        %v1427 = vadd.f32 %v1425, %v1426
        %v1428 = vrot.slane %v1427, 1
        %v1429 = vadd.f32 %v1427, %v1428
        %v1430 = vrot.slane %v1263, 4
        %v1431 = vadd.f32 %v1263, %v1430
        %v1432 = vrot.slane %v1431, 2
        %v1433 = vadd.f32 %v1431, %v1432
        %v1434 = vrot.slane %v1433, 1
        %v1435 = vadd.f32 %v1433, %v1434
        %v1436 = vrot.slane %v1264, 4
        %v1437 = vadd.f32 %v1264, %v1436
        %v1438 = vrot.slane %v1437, 2
        %v1439 = vadd.f32 %v1437, %v1438
        %v1440 = vrot.slane %v1439, 1
        %v1441 = vadd.f32 %v1439, %v1440
        %v1442 = vrot.slane %v1265, 4
        %v1443 = vadd.f32 %v1265, %v1442
        %v1444 = vrot.slane %v1443, 2
        %v1445 = vadd.f32 %v1443, %v1444
        %v1446 = vrot.slane %v1445, 1
        %v1447 = vadd.f32 %v1445, %v1446
        %v1448 = vrot.slane %v1266, 4
        %v1449 = vadd.f32 %v1266, %v1448
        %v1450 = vrot.slane %v1449, 2
        %v1451 = vadd.f32 %v1449, %v1450
        %v1452 = vrot.slane %v1451, 1
        %v1453 = vadd.f32 %v1451, %v1452
        %v1454 = vrot.slane %v1267, 4
        %v1455 = vadd.f32 %v1267, %v1454
        %v1456 = vrot.slane %v1455, 2
        %v1457 = vadd.f32 %v1455, %v1456
        %v1458 = vrot.slane %v1457, 1
        %v1459 = vadd.f32 %v1457, %v1458
        %v1460 = vmul.f32 %v1273, %v562
        %v1461 = vmul.f32 %v1279, %v562
        %v1462 = vmul.f32 %v1285, %v562
        %v1463 = vmul.f32 %v1291, %v562
        %v1464 = vmul.f32 %v1297, %v562
        %v1465 = vmul.f32 %v1303, %v562
        %v1466 = vmul.f32 %v1309, %v562
        %v1467 = vmul.f32 %v1315, %v562
        %v1468 = vmul.f32 %v1321, %v562
        %v1469 = vmul.f32 %v1327, %v562
        %v1470 = vmul.f32 %v1333, %v562
        %v1471 = vmul.f32 %v1339, %v562
        %v1472 = vmul.f32 %v1345, %v562
        %v1473 = vmul.f32 %v1351, %v562
        %v1474 = vmul.f32 %v1357, %v562
        %v1475 = vmul.f32 %v1363, %v562
        %v1476 = vmul.f32 %v1369, %v562
        %v1477 = vmul.f32 %v1375, %v562
        %v1478 = vmul.f32 %v1381, %v562
        %v1479 = vmul.f32 %v1387, %v562
        %v1480 = vmul.f32 %v1393, %v562
        %v1481 = vmul.f32 %v1399, %v562
        %v1482 = vmul.f32 %v1405, %v562
        %v1483 = vmul.f32 %v1411, %v562
        %v1484 = vmul.f32 %v1417, %v562
        %v1485 = vmul.f32 %v1423, %v562
        %v1486 = vmul.f32 %v1429, %v562
        %v1487 = vmul.f32 %v1435, %v562
        %v1488 = vmul.f32 %v1441, %v562
        %v1489 = vmul.f32 %v1447, %v562
        %v1490 = vmul.f32 %v1453, %v562
        %v1491 = vmul.f32 %v1459, %v562
        %v1492 = vmul.f32 %v1204, %v1204
        %v1493 = vmul.f32 %v1205, %v1205
        %v1494 = vmul.f32 %v1206, %v1206
        %v1495 = vmul.f32 %v1207, %v1207
        %v1496 = vmul.f32 %v1208, %v1208
        %v1497 = vmul.f32 %v1209, %v1209
        %v1498 = vmul.f32 %v1210, %v1210
        %v1499 = vmul.f32 %v1211, %v1211
        %v1500 = vmul.f32 %v1212, %v1212
        %v1501 = vmul.f32 %v1213, %v1213
        %v1502 = vmul.f32 %v1214, %v1214
        %v1503 = vmul.f32 %v1215, %v1215
        %v1504 = vmul.f32 %v1216, %v1216
        %v1505 = vmul.f32 %v1217, %v1217
        %v1506 = vmul.f32 %v1218, %v1218
        %v1507 = vmul.f32 %v1219, %v1219
        %v1508 = vmul.f32 %v1220, %v1220
        %v1509 = vmul.f32 %v1221, %v1221
        %v1510 = vmul.f32 %v1222, %v1222
        %v1511 = vmul.f32 %v1223, %v1223
        %v1512 = vmul.f32 %v1224, %v1224
        %v1513 = vmul.f32 %v1225, %v1225
        %v1514 = vmul.f32 %v1226, %v1226
        %v1515 = vmul.f32 %v1227, %v1227
        %v1516 = vmul.f32 %v1228, %v1228
        %v1517 = vmul.f32 %v1229, %v1229
        %v1518 = vmul.f32 %v1230, %v1230
        %v1519 = vmul.f32 %v1231, %v1231
        %v1520 = vmul.f32 %v1232, %v1232
        %v1521 = vmul.f32 %v1233, %v1233
        %v1522 = vmul.f32 %v1234, %v1234
        %v1523 = vmul.f32 %v1235, %v1235
        %v1524 = vsub.f32 %v1460, %v1492
        %v1525 = vsub.f32 %v1461, %v1493
        %v1526 = vsub.f32 %v1462, %v1494
        %v1527 = vsub.f32 %v1463, %v1495
        %v1528 = vsub.f32 %v1464, %v1496
        %v1529 = vsub.f32 %v1465, %v1497
        %v1530 = vsub.f32 %v1466, %v1498
        %v1531 = vsub.f32 %v1467, %v1499
        %v1532 = vsub.f32 %v1468, %v1500
        %v1533 = vsub.f32 %v1469, %v1501
        %v1534 = vsub.f32 %v1470, %v1502
        %v1535 = vsub.f32 %v1471, %v1503
        %v1536 = vsub.f32 %v1472, %v1504
        %v1537 = vsub.f32 %v1473, %v1505
        %v1538 = vsub.f32 %v1474, %v1506
        %v1539 = vsub.f32 %v1475, %v1507
        %v1540 = vsub.f32 %v1476, %v1508
        %v1541 = vsub.f32 %v1477, %v1509
        %v1542 = vsub.f32 %v1478, %v1510
        %v1543 = vsub.f32 %v1479, %v1511
        %v1544 = vsub.f32 %v1480, %v1512
        %v1545 = vsub.f32 %v1481, %v1513
        %v1546 = vsub.f32 %v1482, %v1514
        %v1547 = vsub.f32 %v1483, %v1515
        %v1548 = vsub.f32 %v1484, %v1516
        %v1549 = vsub.f32 %v1485, %v1517
        %v1550 = vsub.f32 %v1486, %v1518
        %v1551 = vsub.f32 %v1487, %v1519
        %v1552 = vsub.f32 %v1488, %v1520
        %v1553 = vsub.f32 %v1489, %v1521
        %v1554 = vsub.f32 %v1490, %v1522
        %v1555 = vsub.f32 %v1491, %v1523
        %v1556 = vmax.f32 %v1524, 0.0
        %v1557 = vmax.f32 %v1525, 0.0
        %v1558 = vmax.f32 %v1526, 0.0
        %v1559 = vmax.f32 %v1527, 0.0
        %v1560 = vmax.f32 %v1528, 0.0
        %v1561 = vmax.f32 %v1529, 0.0
        %v1562 = vmax.f32 %v1530, 0.0
        %v1563 = vmax.f32 %v1531, 0.0
        %v1564 = vmax.f32 %v1532, 0.0
        %v1565 = vmax.f32 %v1533, 0.0
        %v1566 = vmax.f32 %v1534, 0.0
        %v1567 = vmax.f32 %v1535, 0.0
        %v1568 = vmax.f32 %v1536, 0.0
        %v1569 = vmax.f32 %v1537, 0.0
        %v1570 = vmax.f32 %v1538, 0.0
        %v1571 = vmax.f32 %v1539, 0.0
        %v1572 = vmax.f32 %v1540, 0.0
        %v1573 = vmax.f32 %v1541, 0.0
        %v1574 = vmax.f32 %v1542, 0.0
        %v1575 = vmax.f32 %v1543, 0.0
        %v1576 = vmax.f32 %v1544, 0.0
        %v1577 = vmax.f32 %v1545, 0.0
        %v1578 = vmax.f32 %v1546, 0.0
        %v1579 = vmax.f32 %v1547, 0.0
        %v1580 = vmax.f32 %v1548, 0.0
        %v1581 = vmax.f32 %v1549, 0.0
        %v1582 = vmax.f32 %v1550, 0.0
        %v1583 = vmax.f32 %v1551, 0.0
        %v1584 = vmax.f32 %v1552, 0.0
        %v1585 = vmax.f32 %v1553, 0.0
        %v1586 = vmax.f32 %v1554, 0.0
        %v1587 = vmax.f32 %v1555, 0.0
        %v1588 = vsub.f32 %v918, %v1204
        %v1589 = vsub.f32 %v920, %v1205
        %v1590 = vsub.f32 %v924, %v1206
        %v1591 = vsub.f32 %v926, %v1207
        %v1592 = vsub.f32 %v930, %v1208
        %v1593 = vsub.f32 %v932, %v1209
        %v1594 = vsub.f32 %v936, %v1210
        %v1595 = vsub.f32 %v938, %v1211
        %v1596 = vsub.f32 %v942, %v1212
        %v1597 = vsub.f32 %v944, %v1213
        %v1598 = vsub.f32 %v948, %v1214
        %v1599 = vsub.f32 %v950, %v1215
        %v1600 = vsub.f32 %v954, %v1216
        %v1601 = vsub.f32 %v956, %v1217
        %v1602 = vsub.f32 %v960, %v1218
        %v1603 = vsub.f32 %v962, %v1219
        %v1604 = vsub.f32 %v966, %v1220
        %v1605 = vsub.f32 %v968, %v1221
        %v1606 = vsub.f32 %v972, %v1222
        %v1607 = vsub.f32 %v974, %v1223
        %v1608 = vsub.f32 %v978, %v1224
        %v1609 = vsub.f32 %v980, %v1225
        %v1610 = vsub.f32 %v984, %v1226
        %v1611 = vsub.f32 %v986, %v1227
        %v1612 = vsub.f32 %v990, %v1228
        %v1613 = vsub.f32 %v992, %v1229
        %v1614 = vsub.f32 %v996, %v1230
        %v1615 = vsub.f32 %v998, %v1231
        %v1616 = vsub.f32 %v1002, %v1232
        %v1617 = vsub.f32 %v1004, %v1233
        %v1618 = vsub.f32 %v1008, %v1234
        %v1619 = vsub.f32 %v1010, %v1235
        %v1620 = vadd.f32 %v1556, 1e-05
        %v1621 = vadd.f32 %v1557, 1e-05
        %v1622 = vadd.f32 %v1558, 1e-05
        %v1623 = vadd.f32 %v1559, 1e-05
        %v1624 = vadd.f32 %v1560, 1e-05
        %v1625 = vadd.f32 %v1561, 1e-05
        %v1626 = vadd.f32 %v1562, 1e-05
        %v1627 = vadd.f32 %v1563, 1e-05
        %v1628 = vadd.f32 %v1564, 1e-05
        %v1629 = vadd.f32 %v1565, 1e-05
        %v1630 = vadd.f32 %v1566, 1e-05
        %v1631 = vadd.f32 %v1567, 1e-05
        %v1632 = vadd.f32 %v1568, 1e-05
        %v1633 = vadd.f32 %v1569, 1e-05
        %v1634 = vadd.f32 %v1570, 1e-05
        %v1635 = vadd.f32 %v1571, 1e-05
        %v1636 = vadd.f32 %v1572, 1e-05
        %v1637 = vadd.f32 %v1573, 1e-05
        %v1638 = vadd.f32 %v1574, 1e-05
        %v1639 = vadd.f32 %v1575, 1e-05
        %v1640 = vadd.f32 %v1576, 1e-05
        %v1641 = vadd.f32 %v1577, 1e-05
        %v1642 = vadd.f32 %v1578, 1e-05
        %v1643 = vadd.f32 %v1579, 1e-05
        %v1644 = vadd.f32 %v1580, 1e-05
        %v1645 = vadd.f32 %v1581, 1e-05
        %v1646 = vadd.f32 %v1582, 1e-05
        %v1647 = vadd.f32 %v1583, 1e-05
        %v1648 = vadd.f32 %v1584, 1e-05
        %v1649 = vadd.f32 %v1585, 1e-05
        %v1650 = vadd.f32 %v1586, 1e-05
        %v1651 = vadd.f32 %v1587, 1e-05
        %v1652 = vrsqrt.pop %v1620
        %v1653 = vrsqrt.pop %v1621
        %v1654 = vrsqrt.pop %v1622
        %v1655 = vrsqrt.pop %v1623
        %v1656 = vrsqrt.pop %v1624
        %v1657 = vrsqrt.pop %v1625
        %v1658 = vrsqrt.pop %v1626
        %v1659 = vrsqrt.pop %v1627
        %v1660 = vrsqrt.pop %v1628
        %v1661 = vrsqrt.pop %v1629
        %v1662 = vrsqrt.pop %v1630
        %v1663 = vrsqrt.pop %v1631
        %v1664 = vrsqrt.pop %v1632
        %v1665 = vrsqrt.pop %v1633
        %v1666 = vrsqrt.pop %v1634
        %v1667 = vrsqrt.pop %v1635
        %v1668 = vrsqrt.pop %v1636
        %v1669 = vrsqrt.pop %v1637
        %v1670 = vrsqrt.pop %v1638
        %v1671 = vrsqrt.pop %v1639
        %v1672 = vrsqrt.pop %v1640
        %v1673 = vrsqrt.pop %v1641
        %v1674 = vrsqrt.pop %v1642
        %v1675 = vrsqrt.pop %v1643
        %v1676 = vrsqrt.pop %v1644
        %v1677 = vrsqrt.pop %v1645
        %v1678 = vrsqrt.pop %v1646
        %v1679 = vrsqrt.pop %v1647
        %v1680 = vrsqrt.pop %v1648
        %v1681 = vrsqrt.pop %v1649
        %v1682 = vrsqrt.pop %v1650
        %v1683 = vrsqrt.pop %v1651
        %v1684 = vmul.f32 %v1588, %v1652
        %v1685 = vmul.f32 %v1589, %v1653
        %v1686 = vmul.f32 %v1590, %v1654
        %v1687 = vmul.f32 %v1591, %v1655
        %v1688 = vmul.f32 %v1592, %v1656
        %v1689 = vmul.f32 %v1593, %v1657
        %v1690 = vmul.f32 %v1594, %v1658
        %v1691 = vmul.f32 %v1595, %v1659
        %v1692 = vmul.f32 %v1596, %v1660
        %v1693 = vmul.f32 %v1597, %v1661
        %v1694 = vmul.f32 %v1598, %v1662
        %v1695 = vmul.f32 %v1599, %v1663
        %v1696 = vmul.f32 %v1600, %v1664
        %v1697 = vmul.f32 %v1601, %v1665
        %v1698 = vmul.f32 %v1602, %v1666
        %v1699 = vmul.f32 %v1603, %v1667
        %v1700 = vmul.f32 %v1604, %v1668
        %v1701 = vmul.f32 %v1605, %v1669
        %v1702 = vmul.f32 %v1606, %v1670
        %v1703 = vmul.f32 %v1607, %v1671
        %v1704 = vmul.f32 %v1608, %v1672
        %v1705 = vmul.f32 %v1609, %v1673
        %v1706 = vmul.f32 %v1610, %v1674
        %v1707 = vmul.f32 %v1611, %v1675
        %v1708 = vmul.f32 %v1612, %v1676
        %v1709 = vmul.f32 %v1613, %v1677
        %v1710 = vmul.f32 %v1614, %v1678
        %v1711 = vmul.f32 %v1615, %v1679
        %v1712 = vmul.f32 %v1616, %v1680
        %v1713 = vmul.f32 %v1617, %v1681
        %v1714 = vmul.f32 %v1618, %v1682
        %v1715 = vmul.f32 %v1619, %v1683
        %v1716 = vld [vmem:[#allocation8] sm:$0xff]
        %v1717 = vld [vmem:[#allocation8 + $0x8] sm:$0xff]
        %v1718 = vld [vmem:[#allocation8 + $0x10] sm:$0xff]
        %v1719 = vld [vmem:[#allocation8 + $0x18] sm:$0xff]
        %v1720 = vld [vmem:[#allocation8 + $0x20] sm:$0xff]
        %v1721 = vld [vmem:[#allocation8 + $0x28] sm:$0xff]
        %v1722 = vld [vmem:[#allocation8 + $0x30] sm:$0xff]
        %v1723 = vld [vmem:[#allocation8 + $0x38] sm:$0xff]
        %v1724 = vld [vmem:[#allocation8 + $0x40] sm:$0xff]
        %v1725 = vld [vmem:[#allocation8 + $0x48] sm:$0xff]
        %v1726 = vld [vmem:[#allocation8 + $0x50] sm:$0xff]
        %v1727 = vld [vmem:[#allocation8 + $0x58] sm:$0xff]
        %v1728 = vld [vmem:[#allocation8 + $0x60] sm:$0xff]
        %v1729 = vld [vmem:[#allocation8 + $0x68] sm:$0xff]
        %v1730 = vld [vmem:[#allocation8 + $0x70] sm:$0xff]
        %v1731 = vld [vmem:[#allocation8 + $0x78] sm:$0xff]
        %v1732 = vld [vmem:[#allocation8 + $0x80] sm:$0xff]
        %v1733 = vld [vmem:[#allocation8 + $0x88] sm:$0xff]
        %v1734 = vld [vmem:[#allocation8 + $0x90] sm:$0xff]
        %v1735 = vld [vmem:[#allocation8 + $0x98] sm:$0xff]
        %v1736 = vld [vmem:[#allocation8 + $0xa0] sm:$0xff]
        %v1737 = vld [vmem:[#allocation8 + $0xa8] sm:$0xff]
        %v1738 = vld [vmem:[#allocation8 + $0xb0] sm:$0xff]
        %v1739 = vld [vmem:[#allocation8 + $0xb8] sm:$0xff]
        %v1740 = vld [vmem:[#allocation8 + $0xc0] sm:$0xff]
        %v1741 = vld [vmem:[#allocation8 + $0xc8] sm:$0xff]
        %v1742 = vld [vmem:[#allocation8 + $0xd0] sm:$0xff]
        %v1743 = vld [vmem:[#allocation8 + $0xd8] sm:$0xff]
        %v1744 = vld [vmem:[#allocation8 + $0xe0] sm:$0xff]
        %v1745 = vld [vmem:[#allocation8 + $0xe8] sm:$0xff]
        %v1746 = vld [vmem:[#allocation8 + $0xf0] sm:$0xff]
        %v1747 = vld [vmem:[#allocation8 + $0xf8] sm:$0xff]
        %v1748 = vld [vmem:[%s4] sm:$0x1]
        %v1750 = vlaneseq
        %v1751 = vshrl.u32 %v1750, 7
        %v1752 = vsub.s32 0, %v1751
        %v1753 = vrot.slane %v1748, %v1752
        %1755 = vmatprep.subr.mxu0 0.0
        %1756 = vmatpush1.msra.mxu0 %v1731
        %1757 = vmatprep.subr.mxu0 0.0
        %1758 = vmatpush1.msra.mxu0 %v1730
        %1759 = vmatprep.subr.mxu0 0.0
        %1760 = vmatpush1.msra.mxu0 %v1729
        %1761 = vmatprep.subr.mxu0 0.0
        %1762 = vmatpush1.msra.mxu0 %v1728
        %1763 = vmatprep.subr.mxu0 0.0
        %1764 = vmatpush1.msra.mxu0 %v1727
        %1765 = vmatprep.subr.mxu0 0.0
        %1766 = vmatpush1.msra.mxu0 %v1726
        %1767 = vmatprep.subr.mxu0 0.0
        %1768 = vmatpush1.msra.mxu0 %v1725
        %1769 = vmatprep.subr.mxu0 0.0
        %1770 = vmatpush1.msra.mxu0 %v1724
        %1771 = vmatprep.subr.mxu0 0.0
        %1772 = vmatpush1.msra.mxu0 %v1723
        %1773 = vmatprep.subr.mxu0 0.0
        %1774 = vmatpush1.msra.mxu0 %v1722
        %1775 = vmatprep.subr.mxu0 0.0
        %1776 = vmatpush1.msra.mxu0 %v1721
        %1777 = vmatprep.subr.mxu0 0.0
        %1778 = vmatpush1.msra.mxu0 %v1720
        %1779 = vmatprep.subr.mxu0 0.0
        %1780 = vmatpush1.msra.mxu0 %v1719
        %1781 = vmatprep.subr.mxu0 0.0
        %1782 = vmatpush1.msra.mxu0 %v1718
        %1783 = vmatprep.subr.mxu0 0.0
        %1784 = vmatpush1.msra.mxu0 %v1717
        %1785 = vmatprep.subr.mxu0 0.0
        %1786 = vmatpush1.msra.mxu0 %v1716
        %1787 = vmatprep.subr.mxu0 0.0
        %1788 = vmatpush2.msra.mxu0 %v1747
        %1789 = vmatprep.subr.mxu0 0.0
        %1790 = vmatpush2.msra.mxu0 %v1746
        %1791 = vmatprep.subr.mxu0 0.0
        %1792 = vmatpush2.msra.mxu0 %v1745
        %1793 = vmatprep.subr.mxu0 0.0
        %1794 = vmatpush2.msra.mxu0 %v1744
        %1795 = vmatprep.subr.mxu0 0.0
        %1796 = vmatpush2.msra.mxu0 %v1743
        %1797 = vmatprep.subr.mxu0 0.0
        %1798 = vmatpush2.msra.mxu0 %v1742
        %1799 = vmatprep.subr.mxu0 0.0
        %1800 = vmatpush2.msra.mxu0 %v1741
        %1801 = vmatprep.subr.mxu0 0.0
        %1802 = vmatpush2.msra.mxu0 %v1740
        %1803 = vmatprep.subr.mxu0 0.0
        %1804 = vmatpush2.msra.mxu0 %v1739
        %1805 = vmatprep.subr.mxu0 0.0
        %1806 = vmatpush2.msra.mxu0 %v1738
        %1807 = vmatprep.subr.mxu0 0.0
        %1808 = vmatpush2.msra.mxu0 %v1737
        %1809 = vmatprep.subr.mxu0 0.0
        %1810 = vmatpush2.msra.mxu0 %v1736
        %1811 = vmatprep.subr.mxu0 0.0
        %1812 = vmatpush2.msra.mxu0 %v1735
        %1813 = vmatprep.subr.mxu0 0.0
        %1814 = vmatpush2.msra.mxu0 %v1734
        %1815 = vmatprep.subr.mxu0 0.0
        %1816 = vmatpush2.msra.mxu0 %v1733
        %1817 = vmatprep.subr.mxu0 0.0
        %1818 = vmatpush2.msra.mxu0 %v1732
        %1819 = vmatprep.mubr.f32.mxu0 %v1685
        %1820 = vmatmul.mubr.f32.gmra.mxu0 %v1684
        %v1821 = vpop.f32.mrf.mxu0
        %v1822 = vadd.f32 %v1753, %v1821
        %v1823 = vpop.f32.mrf.mxu0
        %1824 = vmatprep.mubr.f32.mxu0 %v1687
        %1825 = vmatmul.mubr.f32.gmra.mxu0 %v1686
        %v1826 = vpop.f32.mrf.mxu0
        %v1827 = vadd.f32 %v1753, %v1826
        %v1828 = vpop.f32.mrf.mxu0
        %1829 = vmatprep.mubr.f32.mxu0 %v1689
        %1830 = vmatmul.mubr.f32.gmra.mxu0 %v1688
        %v1831 = vpop.f32.mrf.mxu0
        %v1832 = vadd.f32 %v1753, %v1831
        %v1833 = vpop.f32.mrf.mxu0
        %1834 = vmatprep.mubr.f32.mxu0 %v1691
        %1835 = vmatmul.mubr.f32.gmra.mxu0 %v1690
        %v1836 = vpop.f32.mrf.mxu0
        %v1837 = vadd.f32 %v1753, %v1836
        %v1838 = vpop.f32.mrf.mxu0
        %1839 = vmatprep.mubr.f32.mxu0 %v1693
        %1840 = vmatmul.mubr.f32.gmra.mxu0 %v1692
        %v1841 = vpop.f32.mrf.mxu0
        %v1842 = vadd.f32 %v1753, %v1841
        %v1843 = vpop.f32.mrf.mxu0
        %1844 = vmatprep.mubr.f32.mxu0 %v1695
        %1845 = vmatmul.mubr.f32.gmra.mxu0 %v1694
        %v1846 = vpop.f32.mrf.mxu0
        %v1847 = vadd.f32 %v1753, %v1846
        %v1848 = vpop.f32.mrf.mxu0
        %1849 = vmatprep.mubr.f32.mxu0 %v1697
        %1850 = vmatmul.mubr.f32.gmra.mxu0 %v1696
        %v1851 = vpop.f32.mrf.mxu0
        %v1852 = vadd.f32 %v1753, %v1851
        %v1853 = vpop.f32.mrf.mxu0
        %1854 = vmatprep.mubr.f32.mxu0 %v1699
        %1855 = vmatmul.mubr.f32.gmra.mxu0 %v1698
        %v1856 = vpop.f32.mrf.mxu0
        %v1857 = vadd.f32 %v1753, %v1856
        %v1858 = vpop.f32.mrf.mxu0
        %1859 = vmatprep.mubr.f32.mxu0 %v1701
        %1860 = vmatmul.mubr.f32.gmra.mxu0 %v1700
        %v1861 = vpop.f32.mrf.mxu0
        %v1862 = vadd.f32 %v1753, %v1861
        %v1863 = vpop.f32.mrf.mxu0
        %1864 = vmatprep.mubr.f32.mxu0 %v1703
        %1865 = vmatmul.mubr.f32.gmra.mxu0 %v1702
        %v1866 = vpop.f32.mrf.mxu0
        %v1867 = vadd.f32 %v1753, %v1866
        %v1868 = vpop.f32.mrf.mxu0
        %1869 = vmatprep.mubr.f32.mxu0 %v1705
        %1870 = vmatmul.mubr.f32.gmra.mxu0 %v1704
        %v1871 = vpop.f32.mrf.mxu0
        %v1872 = vadd.f32 %v1753, %v1871
        %v1873 = vpop.f32.mrf.mxu0
        %1874 = vmatprep.mubr.f32.mxu0 %v1707
        %1875 = vmatmul.mubr.f32.gmra.mxu0 %v1706
        %v1876 = vpop.f32.mrf.mxu0
        %v1877 = vadd.f32 %v1753, %v1876
        %v1878 = vpop.f32.mrf.mxu0
        %1879 = vmatprep.mubr.f32.mxu0 %v1709
        %1880 = vmatmul.mubr.f32.gmra.mxu0 %v1708
        %v1881 = vpop.f32.mrf.mxu0
        %v1882 = vadd.f32 %v1753, %v1881
        %v1883 = vpop.f32.mrf.mxu0
        %1884 = vmatprep.mubr.f32.mxu0 %v1711
        %1885 = vmatmul.mubr.f32.gmra.mxu0 %v1710
        %v1886 = vpop.f32.mrf.mxu0
        %v1887 = vadd.f32 %v1753, %v1886
        %v1888 = vpop.f32.mrf.mxu0
        %1889 = vmatprep.mubr.f32.mxu0 %v1713
        %1890 = vmatmul.mubr.f32.gmra.mxu0 %v1712
        %v1891 = vpop.f32.mrf.mxu0
        %v1892 = vadd.f32 %v1753, %v1891
        %v1893 = vpop.f32.mrf.mxu0
        %1894 = vmatprep.mubr.f32.mxu0 %v1715
        %1895 = vmatmul.mubr.f32.gmra.mxu0 %v1714
        %v1896 = vpop.f32.mrf.mxu0
        %v1897 = vadd.f32 %v1753, %v1896
        %v1898 = vpop.f32.mrf.mxu0
        %1899 = vdwg.mxu0
        %1900 = vst [vmem:[%s286] sm:$0xff] %v1822
        %1901 = vst [vmem:[%s286 + $0x8] sm:$0xff] %v1827
        %1902 = vst [vmem:[%s286 + $0x10] sm:$0xff] %v1832
        %1903 = vst [vmem:[%s286 + $0x18] sm:$0xff] %v1837
        %1904 = vst [vmem:[%s286 + $0x20] sm:$0xff] %v1842
        %1905 = vst [vmem:[%s286 + $0x28] sm:$0xff] %v1847
        %1906 = vst [vmem:[%s286 + $0x30] sm:$0xff] %v1852
        %1907 = vst [vmem:[%s286 + $0x38] sm:$0xff] %v1857
        %1908 = vst [vmem:[%s286 + $0x40] sm:$0xff] %v1862
        %1909 = vst [vmem:[%s286 + $0x48] sm:$0xff] %v1867
        %1910 = vst [vmem:[%s286 + $0x50] sm:$0xff] %v1872
        %1911 = vst [vmem:[%s286 + $0x58] sm:$0xff] %v1877
        %1912 = vst [vmem:[%s286 + $0x60] sm:$0xff] %v1882
        %1913 = vst [vmem:[%s286 + $0x68] sm:$0xff] %v1887
        %1914 = vst [vmem:[%s286 + $0x70] sm:$0xff] %v1892
        %1915 = vst [vmem:[%s286 + $0x78] sm:$0xff] %v1897
        %s1916 = sand.u32 %s142, 1
        %s1917 = scalar_lea.sflag [#allocation4], %s1916
        %s1918 = sand.u32 %s142, 1
        %s1919 = smul.addr %s1918, 128
        %s1920 = scalar_lea.vmem [#allocation10], %s1919
        // Predicated region
        $region57: #{tpu_custom_call.1} parent=39 // pred_check
          %p1921 = pneg %p152
        $region58: #{tpu_custom_call.1} parent=39 // pred_check_branch
          %1923 = sbr.rel (%p1921) target = $region60
        $region59: #{tpu_custom_call.1} parent=39 // pred_region
          %s1924 = smul.u32 16, %s24
          %s1926 = ssub.s32 2048, 2048
          %1927 = vsyncadd %s1917, %s1926
          %s1928 = smul.addr %s1924, 128
          %s1929 = scalar_lea.hbm %s5, %s1928
          %s1930 = sshll.u32 %s1920, 4
          %s1931 = int_to_ptr.vmem [resolvable:$true] %s1930
          %1936 = dma.vmem_to_hbm [thread:$0]  %s1931, 2048, %s1929, %s1917, 128, 128, 8
        $region60: #{tpu_custom_call.1} parent=39 // pred_fallthru
          _
      $region40: #{tpu_custom_call.1} parent=5 // pred_fallthru
        _
      %p1937 = scmp.le.s32.totalorder 2, %s19
      // Predicated region
      $region61: #{tpu_custom_call.1} parent=5 // pred_check
        %p1938 = pneg %p1937
      $region62: #{tpu_custom_call.1} parent=5 // pred_check_branch
        %1940 = sbr.rel (%p1938) target = $region64
      $region63: #{tpu_custom_call.1} parent=5 // pred_region
        %s1941 = ssub.s32 %s19, 2
        // Predicated region
        $region65: #{tpu_custom_call.1} parent=63 // pred_check
          %p1942 = pneg %p158
        $region66: #{tpu_custom_call.1} parent=63 // pred_check_branch
          %1944 = sbr.rel (%p1942) target = $region68
        $region67: #{tpu_custom_call.1} parent=63 // pred_region
          %s1945 = sand.u32 %s143, 1
          %s1946 = scalar_lea.sflag [#allocation4], %s1945
          %s1947 = sand.u32 %s143, 1
          %s1948 = smul.addr %s1947, 128
          %s1949 = scalar_lea.vmem [#allocation10], %s1948
          %1950 = dma.done %s1946, 2048
        $region68: #{tpu_custom_call.1} parent=63 // pred_fallthru
          _
      $region64: #{tpu_custom_call.1} parent=5 // pred_fallthru
        _
    $region6: #{tpu_custom_call.1} parent=1 // loop_footer
      %s23 = sadd.s32 1, %s19
    $region7: #{tpu_custom_call.1} parent=1 // loop_footer_branch
      %18 = sbr.rel target = $region3
    $region8: #{tpu_custom_call.1} parent=1 // loop_exit
      _
    %1951 = vsyncpa [#allocation3], 1
    %s1952 = scalar_lea.sflag [#allocation3], 1
    %1953 = vsyncpa %s1952, 1
    %1954 = vsyncpa [#allocation6], 1
    %1955 = vsyncpa [#allocation9], 1
    %1956 = vsyncpa [#allocation4], 1
    %s1957 = scalar_lea.sflag [#allocation4], 1
    %1958 = vsyncpa %s1957, 1

</llo_original>
